<compile_context>
chip_gen: v5e
topology: v5e:2x2
jax: 0.10.0
libtpu: 0.0.40
codegen_flags: <defaults>
</compile_context>

<pallas_src>
import functools

import numpy as np
import jax
import jax.numpy as jnp
from jax import lax
from jax.experimental import pallas as pl
from jax.experimental.pallas import tpu as pltpu


# ----------------------------------------------------------------------------
# Fused Pallas kernel
# ----------------------------------------------------------------------------

def _up_fused_kernel(x2_ref, x1_ref, awt_ref, ah_ref, mask_ref,
                     w1_ref, b1_ref, w2_ref, b2_ref,
                     o_ref, pad_ref, up3_ref, *, OH, OW, P):
    # x2_ref : (1, C2, S)       skip connection, flat spatial, mxu dtype
    # x1_ref : (1, C1, H, W)    low-res input, mxu dtype
    # awt_ref: (W, OW)          bilinear W-axis matrix (transposed), mxu dtype
    # ah_ref : (OH, H)          bilinear H-axis matrix, mxu dtype
    # mask_ref: (2, S)          [left, right] column-edge masks, mxu dtype
    # w*_ref : (Cout, 9*Cin*)   im2col conv weights, BN scale folded in
    # b*_ref : (Cout, 1)        folded BN bias (f32)
    # o_ref  : (1, Cout, S)     output, flat spatial (NCHW order)
    # pad_ref: (Cmax, P + S + P) mxu-dtype VMEM slab (zero-padded flat image)
    # up3_ref: (C1, OH, OW)     mxu-dtype VMEM staging for the upsample result
    S = OH * OW
    _, C2, _ = x2_ref.shape
    _, C1, H, W = x1_ref.shape
    Cin = C1 + C2
    Cout = o_ref.shape[1]
    Cmax = pad_ref.shape[0]
    mxu_dtype = pad_ref.dtype

    # ---- 0) zero only the two lane-aligned edge strips ----------------------
    # Every interior element is overwritten below before it is read; the
    # strips supply the SAME zero padding for row-out-of-bounds taps.
    pad_ref[:, 0:P] = jnp.zeros((Cmax, P), mxu_dtype)
    pad_ref[:, P + S:P + S + P] = jnp.zeros((Cmax, P), mxu_dtype)

    # ---- 1) skip connection straight into the slab (no concat copy) ---------
    pad_ref[0:C2, P:P + S] = x2_ref[0]

    # ---- 2) separable bilinear 2x upsample (align_corners=True) -------------
    x1 = x1_ref[0]                                               # (C1, H, W)
    # W axis: per-channel (H, W) @ (W, OW), batched over C1.
    t = lax.dot_general(
        x1, jnp.broadcast_to(awt_ref[...], (C1, W, OW)),
        dimension_numbers=(((2,), (1,)), ((0,), (0,))),
        preferred_element_type=jnp.float32)                      # (C1, H, OW)
    # H axis: per-channel (OH, H) @ (H, OW), batched over C1.
    up = lax.dot_general(
        jnp.broadcast_to(ah_ref[...], (C1, OH, H)), t.astype(mxu_dtype),
        dimension_numbers=(((2,), (1,)), ((0,), (0,))),
        preferred_element_type=jnp.float32)                      # (C1, OH, OW)
    up3_ref[...] = up.astype(mxu_dtype)
    # Rows -> flat-spatial lanes of the slab (static per-row stores).
    # TODO(synk): replace with a strided relayout for large OH (code size).
    for oh in range(OH):
        pad_ref[C2:Cin, P + oh * OW:P + (oh + 1) * OW] = up3_ref[:, oh, :]

    # Column-edge masks, loaded once per step.
    mask_l = mask_ref[0:1, :]            # 0 where ow == 0      (dx = -1 taps)
    mask_r = mask_ref[1:2, :]            # 0 where ow == OW - 1 (dx = +1 taps)

    # ---- 3) conv3x3 (BN scale folded into weights) + bias + ReLU ------------
    def conv3x3_bias_relu(cin, w_ref, b_ref):
        # im2col on the flat spatial axis: 9 static lane-shifted views of the
        # slab; only the dx != 0 taps need a column-edge mask (dy OOB reads
        # land in the zeroed strips).
        taps = []
        for dy in (-1, 0, 1):
            for dx in (-1, 0, 1):
                off = dy * OW + dx
                slab = pad_ref[0:cin, P + off:P + off + S]       # (cin, S)
                if dx == -1:
                    slab = slab * mask_l
                elif dx == 1:
                    slab = slab * mask_r
                taps.append(slab)
        patch = jnp.concatenate(taps, axis=0)                    # (9*cin, S)
        y = jnp.dot(w_ref[...], patch,
                    preferred_element_type=jnp.float32)          # (Cout, S)
        return jnp.maximum(y + b_ref[...], 0.0)                  # bias + ReLU

    h = conv3x3_bias_relu(Cin, w1_ref, b1_ref)
    pad_ref[0:Cout, P:P + S] = h.astype(mxu_dtype)               # conv2 input
    o_ref[0] = conv3x3_bias_relu(Cout, w2_ref, b2_ref).astype(o_ref.dtype)


# ----------------------------------------------------------------------------
# Wrapper
# ----------------------------------------------------------------------------

def up_forward(x1, x2, prep):
    """UNet Up.forward. x1: (N, C1, H, W), x2: (N, C2, 2H, 2W). Returns NCHW."""
    mxu_dtype = prep["w1m"].dtype
    N, C1, H, W = x1.shape
    N2, C2, OH, OW = x2.shape
    assert N2 == N and OH == 2 * H and OW == 2 * W
    S = OH * OW
    Cin = C1 + C2
    Cout = prep["w1m"].shape[0]
    assert prep["w1m"].shape[1] == 9 * Cin
    P = ((OW + 1 + 127) // 128) * 128          # lane-aligned edge-pad width
    out_dtype = x1.dtype

    # Free metadata reshape (NCHW contiguous); activations cast to MXU dtype.
    x1c = x1.astype(mxu_dtype)
    x2f = x2.reshape(N, C2, S).astype(mxu_dtype)

    kernel = functools.partial(_up_fused_kernel, OH=OH, OW=OW, P=P)

    out = pl.pallas_call(
        kernel,
        out_shape=jax.ShapeDtypeStruct((N, Cout, S), out_dtype),
        grid=(N,),
        in_specs=[
            pl.BlockSpec((1, C2, S), lambda n: (n, 0, 0)),
            pl.BlockSpec((1, C1, H, W), lambda n: (n, 0, 0, 0)),
            pl.BlockSpec((W, OW), lambda n: (0, 0)),
            pl.BlockSpec((OH, H), lambda n: (0, 0)),
            pl.BlockSpec((2, S), lambda n: (0, 0)),
            pl.BlockSpec((Cout, 9 * Cin), lambda n: (0, 0)),
            pl.BlockSpec((Cout, 1), lambda n: (0, 0)),
            pl.BlockSpec((Cout, 9 * Cout), lambda n: (0, 0)),
            pl.BlockSpec((Cout, 1), lambda n: (0, 0)),
        ],
        out_specs=pl.BlockSpec((1, Cout, S), lambda n: (n, 0, 0)),
        scratch_shapes=[
            pltpu.VMEM((max(Cin, Cout), S + 2 * P), mxu_dtype),
            pltpu.VMEM((C1, OH, OW), mxu_dtype),
        ],
        compiler_params=pltpu.CompilerParams(
            dimension_semantics=("parallel",)),
    )(x2f, x1c, prep["awt"], prep["ah"], prep["masks"],
      prep["w1m"], prep["b1"], prep["w2m"], prep["b2"])

    return out.reshape(N, Cout, OH, OW)        # free metadata reshape to NCHW


# ----------------------------------------------------------------------------
# Parameter / constant construction (deterministic)
# ----------------------------------------------------------------------------

def _bilinear_matrix(in_size, out_size):
    """Interpolation matrix (out_size, in_size), align_corners=True."""
    m = np.zeros((out_size, in_size), np.float32)
    scale = (in_size - 1) / (out_size - 1) if out_size > 1 else 0.0
    for i in range(out_size):
        src = i * scale
        i0 = min(int(np.floor(src)), in_size - 1)
        i1 = min(i0 + 1, in_size - 1)
        f = src - i0
        m[i, i0] += 1.0 - f
        m[i, i1] += f
    return m


def _make_edge_masks(OH, OW):
    """(2, OH*OW) column-edge masks: row0 (ow != 0), row1 (ow != OW-1)."""
    ow = np.arange(OH * OW) % OW
    return np.stack([(ow != 0), (ow != OW - 1)]).astype(np.float32)


def _fold_bn(conv_bias, gamma, beta, mean, var, eps=1e-5):
    s = gamma / jnp.sqrt(var + eps)
    b = s * (conv_bias - mean) + beta
    return (s.reshape(-1, 1).astype(jnp.float32),
            b.reshape(-1, 1).astype(jnp.float32))


def make_params(key, in_channels, out_channels):
    """f32 master parameters (conv weights + eval-mode BN, pre-folded s/b)."""
    ks = jax.random.split(key, 10)
    w1 = jax.random.normal(ks[0], (out_channels, in_channels, 3, 3), jnp.float32) * 0.1
    b1 = jax.random.normal(ks[1], (out_channels,), jnp.float32) * 0.05
    g1 = 1.0 + 0.1 * jax.random.normal(ks[2], (out_channels,), jnp.float32)
    be1 = 0.05 * jax.random.normal(ks[3], (out_channels,), jnp.float32)
    m1 = 0.05 * jax.random.normal(ks[4], (out_channels,), jnp.float32)
    v1 = 0.5 + jax.random.uniform(ks[5], (out_channels,), jnp.float32)

    w2 = jax.random.normal(ks[6], (out_channels, out_channels, 3, 3), jnp.float32) * 0.1
    b2 = jax.random.normal(ks[7], (out_channels,), jnp.float32) * 0.05
    g2 = 1.0 + 0.1 * jax.random.normal(ks[8], (out_channels,), jnp.float32)
    be2 = 0.05 * jax.random.normal(ks[9], (out_channels,), jnp.float32)
    m2 = jnp.zeros((out_channels,), jnp.float32)
    v2 = jnp.ones((out_channels,), jnp.float32)

    s1, bb1 = _fold_bn(b1, g1, be1, m1, v1)
    s2, bb2 = _fold_bn(b2, g2, be2, m2, v2)
    return {"_w1": w1, "_w2": w2, "s1": s1, "b1": bb1, "s2": s2, "b2": bb2}


def prepare_inference_operands(p, H, W, mxu_dtype=jnp.bfloat16):
    """One-time packing/casting of the kernel's static operands."""
    Cout = p["_w1"].shape[0]
    OH, OW = 2 * H, 2 * W

    def im2col(w):
        # (Cout, Cin, 3, 3) -> (Cout, 9*Cin); column = tap*(Cin) + cin, matching
        # the kernel's tap (dy, dx row-major) / cin concatenation order.
        return jnp.transpose(w, (0, 2, 3, 1)).reshape(w.shape[0], -1)

    Ah = _bilinear_matrix(H, OH)            # (OH, H)
    Aw = _bilinear_matrix(W, OW)            # (OW, W)
    return {
        # BN scale folded into the weights -> kernel epilogue is y + b only.
        "w1m": (im2col(p["_w1"]) * p["s1"]).astype(mxu_dtype),
        "w2m": (im2col(p["_w2"]) * p["s2"]).astype(mxu_dtype),
        "b1": p["b1"], "b2": p["b2"],
        "ah": jnp.asarray(Ah, mxu_dtype),
        "awt": jnp.asarray(Aw.T, mxu_dtype),
        "masks": jnp.asarray(_make_edge_masks(OH, OW), mxu_dtype),
    }


# ----------------------------------------------------------------------------
# Pure-JAX reference (for correctness check)
# ----------------------------------------------------------------------------

def reference_forward(x1, x2, p):
    H, W = x1.shape[2], x1.shape[3]
    Ah = jnp.asarray(_bilinear_matrix(H, 2 * H))
    AwT = jnp.asarray(_bilinear_matrix(W, 2 * W).T)
    x1_up = jnp.einsum('oh,nchw,wv->ncov', Ah, x1, AwT)
    x = jnp.concatenate([x2, x1_up], axis=1)

    def block(x, w_oihw, s, b):
        y = lax.conv_general_dilated(x, w_oihw, (1, 1), 'SAME',
                                     dimension_numbers=('NCHW', 'OIHW', 'NCHW'))
        y = y * s.reshape(1, -1, 1, 1) + b.reshape(1, -1, 1, 1)
        return jnp.maximum(y, 0.0)

    x = block(x, p["_w1"], p["s1"], p["b1"])
    x = block(x, p["_w2"], p["s2"], p["b2"])
    return x


# ----------------------------------------------------------------------------
# Main
# ----------------------------------------------------------------------------

if __name__ == "__main__":
    N, C1, H, W = 2, 4, 8, 8          # x1: low-res feature map
    C2 = 4                            # x2: skip connection at 2x resolution
    in_channels = C1 + C2
    out_channels = 4

    key = jax.random.PRNGKey(0)
    k1, k2, kp = jax.random.split(key, 3)
    x1 = jax.random.normal(k1, (N, C1, H, W), jnp.float32)
    x2 = jax.random.normal(k2, (N, C2, 2 * H, 2 * W), jnp.float32)

    params = make_params(kp, in_channels, out_channels)
    ref = jax.block_until_ready(reference_forward(x1, x2, params))

    # f32 MXU path: tight check against the XLA reference.
    prep_f32 = prepare_inference_operands(params, H, W, mxu_dtype=jnp.float32)
    out_f32 = jax.block_until_ready(up_forward(x1, x2, prep_f32))
    np.testing.assert_allclose(np.asarray(out_f32), np.asarray(ref),
                               rtol=5e-4, atol=5e-4)

    # bf16-fed MXU path (preferred on v5e/v6e/v7x; f32 accumulation/epilogue).
    prep_bf16 = prepare_inference_operands(params, H, W, mxu_dtype=jnp.bfloat16)
    out_bf16 = jax.block_until_ready(up_forward(x1, x2, prep_bf16))
    np.testing.assert_allclose(np.asarray(out_bf16), np.asarray(ref),
                               rtol=5e-2, atol=5e-2)

    assert out_f32.shape == (N, out_channels, 2 * H, 2 * W)
    print("KERNEL_OK")
</pallas_src>

<mosaic_0001>
module attributes {stable_mosaic.version = 11 : i64} {
  func.func @_up_fused_kernel(%arg0: i32, %arg1: memref<1x4x256xf32, #tpu.memory_space<vmem>>, %arg2: memref<1x4x8x8xf32, #tpu.memory_space<vmem>>, %arg3: memref<8x16xf32, #tpu.memory_space<vmem>>, %arg4: memref<16x8xf32, #tpu.memory_space<vmem>>, %arg5: memref<2x256xf32, #tpu.memory_space<vmem>>, %arg6: memref<4x72xf32, #tpu.memory_space<vmem>>, %arg7: memref<4x1xf32, #tpu.memory_space<vmem>>, %arg8: memref<4x36xf32, #tpu.memory_space<vmem>>, %arg9: memref<4x1xf32, #tpu.memory_space<vmem>>, %arg10: memref<1x4x256xf32, #tpu.memory_space<vmem>>, %arg11: memref<8x512xf32, #tpu.memory_space<vmem>>, %arg12: memref<4x16x16xf32, #tpu.memory_space<vmem>>) attributes {dimension_semantics = [#tpu.dimension_semantics<parallel>], iteration_bounds = array<i64: 2>, scalar_prefetch = 0 : i64, scratch_operands = 2 : i64, tpu.core_type = #tpu.core_type<tc>, window_params = [{transform_indices = @transform_0, window_bounds = array<i64: 1, 4, 256>}, {transform_indices = @transform_1, window_bounds = array<i64: 1, 4, 8, 8>}, {pipeline_mode = #tpu.pipeline_mode<synchronous>, transform_indices = @transform_2, window_bounds = array<i64: 8, 16>}, {pipeline_mode = #tpu.pipeline_mode<synchronous>, transform_indices = @transform_3, window_bounds = array<i64: 16, 8>}, {pipeline_mode = #tpu.pipeline_mode<synchronous>, transform_indices = @transform_4, window_bounds = array<i64: 2, 256>}, {pipeline_mode = #tpu.pipeline_mode<synchronous>, transform_indices = @transform_5, window_bounds = array<i64: 4, 72>}, {pipeline_mode = #tpu.pipeline_mode<synchronous>, transform_indices = @transform_6, window_bounds = array<i64: 4, 1>}, {pipeline_mode = #tpu.pipeline_mode<synchronous>, transform_indices = @transform_7, window_bounds = array<i64: 4, 36>}, {pipeline_mode = #tpu.pipeline_mode<synchronous>, transform_indices = @transform_8, window_bounds = array<i64: 4, 1>}, {transform_indices = @transform_9, window_bounds = array<i64: 1, 4, 256>}]} {
    %cst = arith.constant 0.000000e+00 : f32
    %0 = vector.broadcast %cst : f32 to vector<8x128xf32>
    %c0 = arith.constant 0 : index
    %c0_0 = arith.constant 0 : index
    %1 = vector.load %arg11[%c0, %c0_0] : memref<8x512xf32, #tpu.memory_space<vmem>>, vector<8x128xf32>
    tpu.vector_store %arg11[%c0, %c0_0], %0 {strides = array<i32>} : memref<8x512xf32, #tpu.memory_space<vmem>>, vector<8x128xf32>,
    %cst_1 = arith.constant 0.000000e+00 : f32
    %2 = vector.broadcast %cst_1 : f32 to vector<8x128xf32>
    %c0_2 = arith.constant 0 : index
    %c384 = arith.constant 384 : index
    %3 = vector.load %arg11[%c0_2, %c384] : memref<8x512xf32, #tpu.memory_space<vmem>>, vector<8x128xf32>
    tpu.vector_store %arg11[%c0_2, %c384], %2 {strides = array<i32>} : memref<8x512xf32, #tpu.memory_space<vmem>>, vector<8x128xf32>,
    %c0_3 = arith.constant 0 : index
    %c0_4 = arith.constant 0 : index
    %c0_5 = arith.constant 0 : index
    %4 = vector.load %arg1[%c0_3, %c0_4, %c0_5] : memref<1x4x256xf32, #tpu.memory_space<vmem>>, vector<1x4x256xf32>
    %5 = vector.shape_cast %4 : vector<1x4x256xf32> to vector<4x256xf32>
    %c0_6 = arith.constant 0 : index
    %c128 = arith.constant 128 : index
    %6 = vector.load %arg11[%c0_6, %c128] : memref<8x512xf32, #tpu.memory_space<vmem>>, vector<4x256xf32>
    tpu.vector_store %arg11[%c0_6, %c128], %5 {strides = array<i32>} : memref<8x512xf32, #tpu.memory_space<vmem>>, vector<4x256xf32>,
    %c0_7 = arith.constant 0 : index
    %c0_8 = arith.constant 0 : index
    %c0_9 = arith.constant 0 : index
    %c0_10 = arith.constant 0 : index
    %7 = vector.load %arg2[%c0_7, %c0_8, %c0_9, %c0_10] : memref<1x4x8x8xf32, #tpu.memory_space<vmem>>, vector<1x4x8x8xf32>
    %8 = vector.shape_cast %7 : vector<1x4x8x8xf32> to vector<4x8x8xf32>
    %c0_11 = arith.constant 0 : index
    %c0_12 = arith.constant 0 : index
    %9 = vector.load %arg3[%c0_11, %c0_12] : memref<8x16xf32, #tpu.memory_space<vmem>>, vector<8x16xf32>
    %10 = vector.shape_cast %9 : vector<8x16xf32> to vector<1x8x16xf32>
    %11 = vector.broadcast %10 : vector<1x8x16xf32> to vector<4x8x16xf32>
    %cst_13 = arith.constant dense<0.000000e+00> : vector<4x8x16xf32>
    %12 = tpu.matmul %8, %11, %cst_13 {dimension_numbers = #tpu.dot_dimension_numbers<[2], [1], [1], [2], [0, 0, 0, 1, 1, 2], [0], [0]>} : vector<4x8x8xf32>, vector<4x8x16xf32>, vector<4x8x16xf32> -> vector<4x8x16xf32>
    %c0_14 = arith.constant 0 : index
    %c0_15 = arith.constant 0 : index
    %13 = vector.load %arg4[%c0_14, %c0_15] : memref<16x8xf32, #tpu.memory_space<vmem>>, vector<16x8xf32>
    %14 = vector.shape_cast %13 : vector<16x8xf32> to vector<1x16x8xf32>
    %15 = vector.broadcast %14 : vector<1x16x8xf32> to vector<4x16x8xf32>
    %cst_16 = arith.constant dense<0.000000e+00> : vector<4x16x16xf32>
    %16 = tpu.matmul %15, %12, %cst_16 {dimension_numbers = #tpu.dot_dimension_numbers<[2], [1], [1], [2], [0, 0, 0, 1, 1, 2], [0], [0]>} : vector<4x16x8xf32>, vector<4x8x16xf32>, vector<4x16x16xf32> -> vector<4x16x16xf32>
    %c0_17 = arith.constant 0 : index
    %c0_18 = arith.constant 0 : index
    %c0_19 = arith.constant 0 : index
    %17 = vector.load %arg12[%c0_17, %c0_18, %c0_19] : memref<4x16x16xf32, #tpu.memory_space<vmem>>, vector<4x16x16xf32>
    tpu.vector_store %arg12[%c0_17, %c0_18, %c0_19], %16 {strides = array<i32>} : memref<4x16x16xf32, #tpu.memory_space<vmem>>, vector<4x16x16xf32>,
    %c0_20 = arith.constant 0 : index
    %c0_21 = arith.constant 0 : index
    %c0_22 = arith.constant 0 : index
    %18 = vector.load %arg12[%c0_20, %c0_21, %c0_22] : memref<4x16x16xf32, #tpu.memory_space<vmem>>, vector<4x1x16xf32>
    %19 = vector.shape_cast %18 : vector<4x1x16xf32> to vector<4x16xf32>
    %c4 = arith.constant 4 : index
    %c128_23 = arith.constant 128 : index
    %20 = vector.load %arg11[%c4, %c128_23] : memref<8x512xf32, #tpu.memory_space<vmem>>, vector<4x16xf32>
    tpu.vector_store %arg11[%c4, %c128_23], %19 {strides = array<i32>} : memref<8x512xf32, #tpu.memory_space<vmem>>, vector<4x16xf32>,
    %c0_24 = arith.constant 0 : index
    %c1 = arith.constant 1 : index
    %c0_25 = arith.constant 0 : index
    %21 = vector.load %arg12[%c0_24, %c1, %c0_25] : memref<4x16x16xf32, #tpu.memory_space<vmem>>, vector<4x1x16xf32>
    %22 = vector.shape_cast %21 : vector<4x1x16xf32> to vector<4x16xf32>
    %c4_26 = arith.constant 4 : index
    %c144 = arith.constant 144 : index
    %23 = vector.load %arg11[%c4_26, %c144] : memref<8x512xf32, #tpu.memory_space<vmem>>, vector<4x16xf32>
    tpu.vector_store %arg11[%c4_26, %c144], %22 {strides = array<i32>} : memref<8x512xf32, #tpu.memory_space<vmem>>, vector<4x16xf32>,
    %c0_27 = arith.constant 0 : index
    %c2 = arith.constant 2 : index
    %c0_28 = arith.constant 0 : index
    %24 = vector.load %arg12[%c0_27, %c2, %c0_28] : memref<4x16x16xf32, #tpu.memory_space<vmem>>, vector<4x1x16xf32>
    %25 = vector.shape_cast %24 : vector<4x1x16xf32> to vector<4x16xf32>
    %c4_29 = arith.constant 4 : index
    %c160 = arith.constant 160 : index
    %26 = vector.load %arg11[%c4_29, %c160] : memref<8x512xf32, #tpu.memory_space<vmem>>, vector<4x16xf32>
    tpu.vector_store %arg11[%c4_29, %c160], %25 {strides = array<i32>} : memref<8x512xf32, #tpu.memory_space<vmem>>, vector<4x16xf32>,
    %c0_30 = arith.constant 0 : index
    %c3 = arith.constant 3 : index
    %c0_31 = arith.constant 0 : index
    %27 = vector.load %arg12[%c0_30, %c3, %c0_31] : memref<4x16x16xf32, #tpu.memory_space<vmem>>, vector<4x1x16xf32>
    %28 = vector.shape_cast %27 : vector<4x1x16xf32> to vector<4x16xf32>
    %c4_32 = arith.constant 4 : index
    %c176 = arith.constant 176 : index
    %29 = vector.load %arg11[%c4_32, %c176] : memref<8x512xf32, #tpu.memory_space<vmem>>, vector<4x16xf32>
    tpu.vector_store %arg11[%c4_32, %c176], %28 {strides = array<i32>} : memref<8x512xf32, #tpu.memory_space<vmem>>, vector<4x16xf32>,
    %c0_33 = arith.constant 0 : index
    %c4_34 = arith.constant 4 : index
    %c0_35 = arith.constant 0 : index
    %30 = vector.load %arg12[%c0_33, %c4_34, %c0_35] : memref<4x16x16xf32, #tpu.memory_space<vmem>>, vector<4x1x16xf32>
    %31 = vector.shape_cast %30 : vector<4x1x16xf32> to vector<4x16xf32>
    %c4_36 = arith.constant 4 : index
    %c192 = arith.constant 192 : index
    %32 = vector.load %arg11[%c4_36, %c192] : memref<8x512xf32, #tpu.memory_space<vmem>>, vector<4x16xf32>
    tpu.vector_store %arg11[%c4_36, %c192], %31 {strides = array<i32>} : memref<8x512xf32, #tpu.memory_space<vmem>>, vector<4x16xf32>,
    %c0_37 = arith.constant 0 : index
    %c5 = arith.constant 5 : index
    %c0_38 = arith.constant 0 : index
    %33 = vector.load %arg12[%c0_37, %c5, %c0_38] : memref<4x16x16xf32, #tpu.memory_space<vmem>>, vector<4x1x16xf32>
    %34 = vector.shape_cast %33 : vector<4x1x16xf32> to vector<4x16xf32>
    %c4_39 = arith.constant 4 : index
    %c208 = arith.constant 208 : index
    %35 = vector.load %arg11[%c4_39, %c208] : memref<8x512xf32, #tpu.memory_space<vmem>>, vector<4x16xf32>
    tpu.vector_store %arg11[%c4_39, %c208], %34 {strides = array<i32>} : memref<8x512xf32, #tpu.memory_space<vmem>>, vector<4x16xf32>,
    %c0_40 = arith.constant 0 : index
    %c6 = arith.constant 6 : index
    %c0_41 = arith.constant 0 : index
    %36 = vector.load %arg12[%c0_40, %c6, %c0_41] : memref<4x16x16xf32, #tpu.memory_space<vmem>>, vector<4x1x16xf32>
    %37 = vector.shape_cast %36 : vector<4x1x16xf32> to vector<4x16xf32>
    %c4_42 = arith.constant 4 : index
    %c224 = arith.constant 224 : index
    %38 = vector.load %arg11[%c4_42, %c224] : memref<8x512xf32, #tpu.memory_space<vmem>>, vector<4x16xf32>
    tpu.vector_store %arg11[%c4_42, %c224], %37 {strides = array<i32>} : memref<8x512xf32, #tpu.memory_space<vmem>>, vector<4x16xf32>,
    %c0_43 = arith.constant 0 : index
    %c7 = arith.constant 7 : index
    %c0_44 = arith.constant 0 : index
    %39 = vector.load %arg12[%c0_43, %c7, %c0_44] : memref<4x16x16xf32, #tpu.memory_space<vmem>>, vector<4x1x16xf32>
    %40 = vector.shape_cast %39 : vector<4x1x16xf32> to vector<4x16xf32>
    %c4_45 = arith.constant 4 : index
    %c240 = arith.constant 240 : index
    %41 = vector.load %arg11[%c4_45, %c240] : memref<8x512xf32, #tpu.memory_space<vmem>>, vector<4x16xf32>
    tpu.vector_store %arg11[%c4_45, %c240], %40 {strides = array<i32>} : memref<8x512xf32, #tpu.memory_space<vmem>>, vector<4x16xf32>,
    %c0_46 = arith.constant 0 : index
    %c8 = arith.constant 8 : index
    %c0_47 = arith.constant 0 : index
    %42 = vector.load %arg12[%c0_46, %c8, %c0_47] : memref<4x16x16xf32, #tpu.memory_space<vmem>>, vector<4x1x16xf32>
    %43 = vector.shape_cast %42 : vector<4x1x16xf32> to vector<4x16xf32>
    %c4_48 = arith.constant 4 : index
    %c256 = arith.constant 256 : index
    %44 = vector.load %arg11[%c4_48, %c256] : memref<8x512xf32, #tpu.memory_space<vmem>>, vector<4x16xf32>
    tpu.vector_store %arg11[%c4_48, %c256], %43 {strides = array<i32>} : memref<8x512xf32, #tpu.memory_space<vmem>>, vector<4x16xf32>,
    %c0_49 = arith.constant 0 : index
    %c9 = arith.constant 9 : index
    %c0_50 = arith.constant 0 : index
    %45 = vector.load %arg12[%c0_49, %c9, %c0_50] : memref<4x16x16xf32, #tpu.memory_space<vmem>>, vector<4x1x16xf32>
    %46 = vector.shape_cast %45 : vector<4x1x16xf32> to vector<4x16xf32>
    %c4_51 = arith.constant 4 : index
    %c272 = arith.constant 272 : index
    %47 = vector.load %arg11[%c4_51, %c272] : memref<8x512xf32, #tpu.memory_space<vmem>>, vector<4x16xf32>
    tpu.vector_store %arg11[%c4_51, %c272], %46 {strides = array<i32>} : memref<8x512xf32, #tpu.memory_space<vmem>>, vector<4x16xf32>,
    %c0_52 = arith.constant 0 : index
    %c10 = arith.constant 10 : index
    %c0_53 = arith.constant 0 : index
    %48 = vector.load %arg12[%c0_52, %c10, %c0_53] : memref<4x16x16xf32, #tpu.memory_space<vmem>>, vector<4x1x16xf32>
    %49 = vector.shape_cast %48 : vector<4x1x16xf32> to vector<4x16xf32>
    %c4_54 = arith.constant 4 : index
    %c288 = arith.constant 288 : index
    %50 = vector.load %arg11[%c4_54, %c288] : memref<8x512xf32, #tpu.memory_space<vmem>>, vector<4x16xf32>
    tpu.vector_store %arg11[%c4_54, %c288], %49 {strides = array<i32>} : memref<8x512xf32, #tpu.memory_space<vmem>>, vector<4x16xf32>,
    %c0_55 = arith.constant 0 : index
    %c11 = arith.constant 11 : index
    %c0_56 = arith.constant 0 : index
    %51 = vector.load %arg12[%c0_55, %c11, %c0_56] : memref<4x16x16xf32, #tpu.memory_space<vmem>>, vector<4x1x16xf32>
    %52 = vector.shape_cast %51 : vector<4x1x16xf32> to vector<4x16xf32>
    %c4_57 = arith.constant 4 : index
    %c304 = arith.constant 304 : index
    %53 = vector.load %arg11[%c4_57, %c304] : memref<8x512xf32, #tpu.memory_space<vmem>>, vector<4x16xf32>
    tpu.vector_store %arg11[%c4_57, %c304], %52 {strides = array<i32>} : memref<8x512xf32, #tpu.memory_space<vmem>>, vector<4x16xf32>,
    %c0_58 = arith.constant 0 : index
    %c12 = arith.constant 12 : index
    %c0_59 = arith.constant 0 : index
    %54 = vector.load %arg12[%c0_58, %c12, %c0_59] : memref<4x16x16xf32, #tpu.memory_space<vmem>>, vector<4x1x16xf32>
    %55 = vector.shape_cast %54 : vector<4x1x16xf32> to vector<4x16xf32>
    %c4_60 = arith.constant 4 : index
    %c320 = arith.constant 320 : index
    %56 = vector.load %arg11[%c4_60, %c320] : memref<8x512xf32, #tpu.memory_space<vmem>>, vector<4x16xf32>
    tpu.vector_store %arg11[%c4_60, %c320], %55 {strides = array<i32>} : memref<8x512xf32, #tpu.memory_space<vmem>>, vector<4x16xf32>,
    %c0_61 = arith.constant 0 : index
    %c13 = arith.constant 13 : index
    %c0_62 = arith.constant 0 : index
    %57 = vector.load %arg12[%c0_61, %c13, %c0_62] : memref<4x16x16xf32, #tpu.memory_space<vmem>>, vector<4x1x16xf32>
    %58 = vector.shape_cast %57 : vector<4x1x16xf32> to vector<4x16xf32>
    %c4_63 = arith.constant 4 : index
    %c336 = arith.constant 336 : index
    %59 = vector.load %arg11[%c4_63, %c336] : memref<8x512xf32, #tpu.memory_space<vmem>>, vector<4x16xf32>
    tpu.vector_store %arg11[%c4_63, %c336], %58 {strides = array<i32>} : memref<8x512xf32, #tpu.memory_space<vmem>>, vector<4x16xf32>,
    %c0_64 = arith.constant 0 : index
    %c14 = arith.constant 14 : index
    %c0_65 = arith.constant 0 : index
    %60 = vector.load %arg12[%c0_64, %c14, %c0_65] : memref<4x16x16xf32, #tpu.memory_space<vmem>>, vector<4x1x16xf32>
    %61 = vector.shape_cast %60 : vector<4x1x16xf32> to vector<4x16xf32>
    %c4_66 = arith.constant 4 : index
    %c352 = arith.constant 352 : index
    %62 = vector.load %arg11[%c4_66, %c352] : memref<8x512xf32, #tpu.memory_space<vmem>>, vector<4x16xf32>
    tpu.vector_store %arg11[%c4_66, %c352], %61 {strides = array<i32>} : memref<8x512xf32, #tpu.memory_space<vmem>>, vector<4x16xf32>,
    %c0_67 = arith.constant 0 : index
    %c15 = arith.constant 15 : index
    %c0_68 = arith.constant 0 : index
    %63 = vector.load %arg12[%c0_67, %c15, %c0_68] : memref<4x16x16xf32, #tpu.memory_space<vmem>>, vector<4x1x16xf32>
    %64 = vector.shape_cast %63 : vector<4x1x16xf32> to vector<4x16xf32>
    %c4_69 = arith.constant 4 : index
    %c368 = arith.constant 368 : index
    %65 = vector.load %arg11[%c4_69, %c368] : memref<8x512xf32, #tpu.memory_space<vmem>>, vector<4x16xf32>
    tpu.vector_store %arg11[%c4_69, %c368], %64 {strides = array<i32>} : memref<8x512xf32, #tpu.memory_space<vmem>>, vector<4x16xf32>,
    %c0_70 = arith.constant 0 : index
    %c0_71 = arith.constant 0 : index
    %66 = vector.load %arg5[%c0_70, %c0_71] : memref<2x256xf32, #tpu.memory_space<vmem>>, vector<1x256xf32>
    %c1_72 = arith.constant 1 : index
    %c0_73 = arith.constant 0 : index
    %67 = vector.load %arg5[%c1_72, %c0_73] : memref<2x256xf32, #tpu.memory_space<vmem>>, vector<1x256xf32>
    %c0_74 = arith.constant 0 : index
    %c111 = arith.constant 111 : index
    %68 = vector.load %arg11[%c0_74, %c111] : memref<8x512xf32, #tpu.memory_space<vmem>>, vector<8x256xf32>
    %69 = vector.broadcast %66 : vector<1x256xf32> to vector<8x256xf32>
    %70 = arith.mulf %68, %69 : vector<8x256xf32>
    %c0_75 = arith.constant 0 : index
    %c112 = arith.constant 112 : index
    %71 = vector.load %arg11[%c0_75, %c112] : memref<8x512xf32, #tpu.memory_space<vmem>>, vector<8x256xf32>
    %c0_76 = arith.constant 0 : index
    %c113 = arith.constant 113 : index
    %72 = vector.load %arg11[%c0_76, %c113] : memref<8x512xf32, #tpu.memory_space<vmem>>, vector<8x256xf32>
    %73 = vector.broadcast %67 : vector<1x256xf32> to vector<8x256xf32>
    %74 = arith.mulf %72, %73 : vector<8x256xf32>
    %c0_77 = arith.constant 0 : index
    %c127 = arith.constant 127 : index
    %75 = vector.load %arg11[%c0_77, %c127] : memref<8x512xf32, #tpu.memory_space<vmem>>, vector<8x256xf32>
    %76 = vector.broadcast %66 : vector<1x256xf32> to vector<8x256xf32>
    %77 = arith.mulf %75, %76 : vector<8x256xf32>
    %c0_78 = arith.constant 0 : index
    %c128_79 = arith.constant 128 : index
    %78 = vector.load %arg11[%c0_78, %c128_79] : memref<8x512xf32, #tpu.memory_space<vmem>>, vector<8x256xf32>
    %c0_80 = arith.constant 0 : index
    %c129 = arith.constant 129 : index
    %79 = vector.load %arg11[%c0_80, %c129] : memref<8x512xf32, #tpu.memory_space<vmem>>, vector<8x256xf32>
    %80 = vector.broadcast %67 : vector<1x256xf32> to vector<8x256xf32>
    %81 = arith.mulf %79, %80 : vector<8x256xf32>
    %c0_81 = arith.constant 0 : index
    %c143 = arith.constant 143 : index
    %82 = vector.load %arg11[%c0_81, %c143] : memref<8x512xf32, #tpu.memory_space<vmem>>, vector<8x256xf32>
    %83 = vector.broadcast %66 : vector<1x256xf32> to vector<8x256xf32>
    %84 = arith.mulf %82, %83 : vector<8x256xf32>
    %c0_82 = arith.constant 0 : index
    %c144_83 = arith.constant 144 : index
    %85 = vector.load %arg11[%c0_82, %c144_83] : memref<8x512xf32, #tpu.memory_space<vmem>>, vector<8x256xf32>
    %c0_84 = arith.constant 0 : index
    %c145 = arith.constant 145 : index
    %86 = vector.load %arg11[%c0_84, %c145] : memref<8x512xf32, #tpu.memory_space<vmem>>, vector<8x256xf32>
    %87 = vector.broadcast %67 : vector<1x256xf32> to vector<8x256xf32>
    %88 = arith.mulf %86, %87 : vector<8x256xf32>
    %89 = tpu.concatenate %70, %71, %74, %77, %78, %81, %84, %85, %88 in 0 : vector<8x256xf32>, vector<8x256xf32>, vector<8x256xf32>, vector<8x256xf32>, vector<8x256xf32>, vector<8x256xf32>, vector<8x256xf32>, vector<8x256xf32>, vector<8x256xf32> -> vector<72x256xf32>
    %c0_85 = arith.constant 0 : index
    %c0_86 = arith.constant 0 : index
    %90 = vector.load %arg6[%c0_85, %c0_86] : memref<4x72xf32, #tpu.memory_space<vmem>>, vector<4x72xf32>
    %cst_87 = arith.constant dense<0.000000e+00> : vector<4x256xf32>
    %91 = tpu.matmul %90, %89, %cst_87 {dimension_numbers = #tpu.dot_dimension_numbers<[1], [0], [0], [1], [0, 0, 1, 1], [], []>} : vector<4x72xf32>, vector<72x256xf32>, vector<4x256xf32> -> vector<4x256xf32>
    %c0_88 = arith.constant 0 : index
    %c0_89 = arith.constant 0 : index
    %92 = vector.load %arg7[%c0_88, %c0_89] : memref<4x1xf32, #tpu.memory_space<vmem>>, vector<4x1xf32>
    %93 = vector.broadcast %92 : vector<4x1xf32> to vector<4x256xf32>
    %94 = arith.addf %91, %93 : vector<4x256xf32>
    %cst_90 = arith.constant 0.000000e+00 : f32
    %95 = vector.broadcast %cst_90 : f32 to vector<4x256xf32>
    %96 = arith.maximumf %94, %95 : vector<4x256xf32>
    %c0_91 = arith.constant 0 : index
    %c128_92 = arith.constant 128 : index
    %97 = vector.load %arg11[%c0_91, %c128_92] : memref<8x512xf32, #tpu.memory_space<vmem>>, vector<4x256xf32>
    tpu.vector_store %arg11[%c0_91, %c128_92], %96 {strides = array<i32>} : memref<8x512xf32, #tpu.memory_space<vmem>>, vector<4x256xf32>,
    %c0_93 = arith.constant 0 : index
    %c111_94 = arith.constant 111 : index
    %98 = vector.load %arg11[%c0_93, %c111_94] : memref<8x512xf32, #tpu.memory_space<vmem>>, vector<4x256xf32>
    %99 = vector.broadcast %66 : vector<1x256xf32> to vector<4x256xf32>
    %100 = arith.mulf %98, %99 : vector<4x256xf32>
    %c0_95 = arith.constant 0 : index
    %c112_96 = arith.constant 112 : index
    %101 = vector.load %arg11[%c0_95, %c112_96] : memref<8x512xf32, #tpu.memory_space<vmem>>, vector<4x256xf32>
    %c0_97 = arith.constant 0 : index
    %c113_98 = arith.constant 113 : index
    %102 = vector.load %arg11[%c0_97, %c113_98] : memref<8x512xf32, #tpu.memory_space<vmem>>, vector<4x256xf32>
    %103 = vector.broadcast %67 : vector<1x256xf32> to vector<4x256xf32>
    %104 = arith.mulf %102, %103 : vector<4x256xf32>
    %c0_99 = arith.constant 0 : index
    %c127_100 = arith.constant 127 : index
    %105 = vector.load %arg11[%c0_99, %c127_100] : memref<8x512xf32, #tpu.memory_space<vmem>>, vector<4x256xf32>
    %106 = vector.broadcast %66 : vector<1x256xf32> to vector<4x256xf32>
    %107 = arith.mulf %105, %106 : vector<4x256xf32>
    %c0_101 = arith.constant 0 : index
    %c128_102 = arith.constant 128 : index
    %108 = vector.load %arg11[%c0_101, %c128_102] : memref<8x512xf32, #tpu.memory_space<vmem>>, vector<4x256xf32>
    %c0_103 = arith.constant 0 : index
    %c129_104 = arith.constant 129 : index
    %109 = vector.load %arg11[%c0_103, %c129_104] : memref<8x512xf32, #tpu.memory_space<vmem>>, vector<4x256xf32>
    %110 = vector.broadcast %67 : vector<1x256xf32> to vector<4x256xf32>
    %111 = arith.mulf %109, %110 : vector<4x256xf32>
    %c0_105 = arith.constant 0 : index
    %c143_106 = arith.constant 143 : index
    %112 = vector.load %arg11[%c0_105, %c143_106] : memref<8x512xf32, #tpu.memory_space<vmem>>, vector<4x256xf32>
    %113 = vector.broadcast %66 : vector<1x256xf32> to vector<4x256xf32>
    %114 = arith.mulf %112, %113 : vector<4x256xf32>
    %c0_107 = arith.constant 0 : index
    %c144_108 = arith.constant 144 : index
    %115 = vector.load %arg11[%c0_107, %c144_108] : memref<8x512xf32, #tpu.memory_space<vmem>>, vector<4x256xf32>
    %c0_109 = arith.constant 0 : index
    %c145_110 = arith.constant 145 : index
    %116 = vector.load %arg11[%c0_109, %c145_110] : memref<8x512xf32, #tpu.memory_space<vmem>>, vector<4x256xf32>
    %117 = vector.broadcast %67 : vector<1x256xf32> to vector<4x256xf32>
    %118 = arith.mulf %116, %117 : vector<4x256xf32>
    %119 = tpu.concatenate %100, %101, %104, %107, %108, %111, %114, %115, %118 in 0 : vector<4x256xf32>, vector<4x256xf32>, vector<4x256xf32>, vector<4x256xf32>, vector<4x256xf32>, vector<4x256xf32>, vector<4x256xf32>, vector<4x256xf32>, vector<4x256xf32> -> vector<36x256xf32>
    %c0_111 = arith.constant 0 : index
    %c0_112 = arith.constant 0 : index
    %120 = vector.load %arg8[%c0_111, %c0_112] : memref<4x36xf32, #tpu.memory_space<vmem>>, vector<4x36xf32>
    %cst_113 = arith.constant dense<0.000000e+00> : vector<4x256xf32>
    %121 = tpu.matmul %120, %119, %cst_113 {dimension_numbers = #tpu.dot_dimension_numbers<[1], [0], [0], [1], [0, 0, 1, 1], [], []>} : vector<4x36xf32>, vector<36x256xf32>, vector<4x256xf32> -> vector<4x256xf32>
    %c0_114 = arith.constant 0 : index
    %c0_115 = arith.constant 0 : index
    %122 = vector.load %arg9[%c0_114, %c0_115] : memref<4x1xf32, #tpu.memory_space<vmem>>, vector<4x1xf32>
    %123 = vector.broadcast %122 : vector<4x1xf32> to vector<4x256xf32>
    %124 = arith.addf %121, %123 : vector<4x256xf32>
    %cst_116 = arith.constant 0.000000e+00 : f32
    %125 = vector.broadcast %cst_116 : f32 to vector<4x256xf32>
    %126 = arith.maximumf %124, %125 : vector<4x256xf32>
    %c0_117 = arith.constant 0 : index
    %c0_118 = arith.constant 0 : index
    %c0_119 = arith.constant 0 : index
    %127 = vector.load %arg10[%c0_117, %c0_118, %c0_119] : memref<1x4x256xf32, #tpu.memory_space<vmem>>, vector<1x4x256xf32>
    %128 = vector.shape_cast %127 : vector<1x4x256xf32> to vector<4x256xf32>
    %129 = vector.shape_cast %126 : vector<4x256xf32> to vector<1x4x256xf32>
    tpu.vector_store %arg10[%c0_117, %c0_118, %c0_119], %129 {strides = array<i32>} : memref<1x4x256xf32, #tpu.memory_space<vmem>>, vector<1x4x256xf32>,
    return
  }
  func.func @transform_0(%arg0: i32) -> (i32, i32, i32) {
    %c0_i32 = arith.constant 0 : i32
    %c0_i32_0 = arith.constant 0 : i32
    %c0_i32_1 = arith.constant 0 : i32
    return %arg0, %c0_i32, %c0_i32_0 : i32, i32, i32
  }
  func.func @transform_1(%arg0: i32) -> (i32, i32, i32, i32) {
    %c0_i32 = arith.constant 0 : i32
    %c0_i32_0 = arith.constant 0 : i32
    %c0_i32_1 = arith.constant 0 : i32
    %c0_i32_2 = arith.constant 0 : i32
    return %arg0, %c0_i32, %c0_i32_0, %c0_i32_1 : i32, i32, i32, i32
  }
  func.func @transform_2(%arg0: i32) -> (i32, i32) {
    %c0_i32 = arith.constant 0 : i32
    %c0_i32_0 = arith.constant 0 : i32
    %c0_i32_1 = arith.constant 0 : i32
    return %c0_i32, %c0_i32_0 : i32, i32
  }
  func.func @transform_3(%arg0: i32) -> (i32, i32) {
    %c0_i32 = arith.constant 0 : i32
    %c0_i32_0 = arith.constant 0 : i32
    %c0_i32_1 = arith.constant 0 : i32
    return %c0_i32, %c0_i32_0 : i32, i32
  }
  func.func @transform_4(%arg0: i32) -> (i32, i32) {
    %c0_i32 = arith.constant 0 : i32
    %c0_i32_0 = arith.constant 0 : i32
    %c0_i32_1 = arith.constant 0 : i32
    return %c0_i32, %c0_i32_0 : i32, i32
  }
  func.func @transform_5(%arg0: i32) -> (i32, i32) {
    %c0_i32 = arith.constant 0 : i32
    %c0_i32_0 = arith.constant 0 : i32
    %c0_i32_1 = arith.constant 0 : i32
    return %c0_i32, %c0_i32_0 : i32, i32
  }
  func.func @transform_6(%arg0: i32) -> (i32, i32) {
    %c0_i32 = arith.constant 0 : i32
    %c0_i32_0 = arith.constant 0 : i32
    %c0_i32_1 = arith.constant 0 : i32
    return %c0_i32, %c0_i32_0 : i32, i32
  }
  func.func @transform_7(%arg0: i32) -> (i32, i32) {
    %c0_i32 = arith.constant 0 : i32
    %c0_i32_0 = arith.constant 0 : i32
    %c0_i32_1 = arith.constant 0 : i32
    return %c0_i32, %c0_i32_0 : i32, i32
  }
  func.func @transform_8(%arg0: i32) -> (i32, i32) {
    %c0_i32 = arith.constant 0 : i32
    %c0_i32_0 = arith.constant 0 : i32
    %c0_i32_1 = arith.constant 0 : i32
    return %c0_i32, %c0_i32_0 : i32, i32
  }
  func.func @transform_9(%arg0: i32) -> (i32, i32, i32) {
    %c0_i32 = arith.constant 0 : i32
    %c0_i32_0 = arith.constant 0 : i32
    %c0_i32_1 = arith.constant 0 : i32
    return %arg0, %c0_i32, %c0_i32_0 : i32, i32, i32
  }
}

</mosaic_0001>

<llo_original>
// kernel: tpu_custom_call.1
$region0: #{tpu_custom_call.1}
  #allocation0 [shape = 'u32[]', space=smem, size = 0x4, offset = 0x4, fixed_abs, tag = 'smem constant byte address 0x4 - core index']
  #allocation1 [shape = 'u32[72,128]{1,0:T(1,128)}', space=vmem, size = 0x9000, scoped, tag = 'internal scratch']
  #allocation2 [shape = 'f32[8,512]{1,0:T(8,128)}', space=vmem, size = 0x4000, scoped, tag = 'scratch operand']
  #allocation3 [shape = 'f32[4,16,16]{2,1,0:T(8,128)}', space=vmem, size = 0x8000, scoped, tag = 'scratch operand']
  %s0 = inlined_call_operand.vmem [shape: f32[2,4,256], index: 0, kind: input, shape index: {}]
  %s1 = inlined_call_operand.hbm [shape: f32[2,4,8,8], index: 1, kind: input, shape index: {}]
  %s2 = inlined_call_operand.vmem [shape: f32[8,16], index: 2, kind: input, shape index: {}]
  %s3 = inlined_call_operand.vmem [shape: f32[16,8], index: 3, kind: input, shape index: {}]
  %s4 = inlined_call_operand.hbm [shape: f32[2,256], index: 4, kind: input, shape index: {}]
  %s5 = inlined_call_operand.hbm [shape: f32[4,72], index: 5, kind: input, shape index: {}]
  %s6 = inlined_call_operand.vmem [shape: f32[4,1], index: 6, kind: input, shape index: {}]
  %s7 = inlined_call_operand.vmem [shape: f32[4,36], index: 7, kind: input, shape index: {}]
  %s8 = inlined_call_operand.vmem [shape: f32[4,1], index: 8, kind: input, shape index: {}]
  %s9 = inlined_call_operand.hbm [shape: f32[2,4,256], index: 9, kind: output, shape index: {}]
  %s10 = sld [smem:[#allocation0]]
  $region81: #{tpu_custom_call.1} parent=0
    _
  %s12 = ssub.s32 1, %s10
  %s13 = scalar_select 0, %s12, %s10
  $region1: #{tpu_custom_call.1} parent=0
    #allocation4 [shape = 'u8[32768]{0}', space=vmem, size = 0x8000, scoped, tag = 'input window, operand 1']
    #allocation5 [shape = 's32[2]{0}', space=sflag, size = 0x8, scoped, tag = 'scoped memory for tpu_custom_call.1']
    #allocation6 [shape = 's32[2]{0}', space=sflag, size = 0x8, scoped, tag = 'scoped memory for tpu_custom_call.1']
    #allocation7 [shape = 'u8[2048]{0}', space=vmem, size = 0x800, scoped, tag = 'input window, operand 4, single buffered']
    #allocation8 [shape = 's32[1]{0}', space=sflag, size = 0x4, scoped, tag = 'scoped memory for tpu_custom_call.1']
    #allocation9 [shape = 'u8[2048]{0}', space=vmem, size = 0x800, scoped, tag = 'input window, operand 5, single buffered']
    #allocation10 [shape = 'u8[8192]{0}', space=vmem, size = 0x2000, scoped, tag = 'output window, operand 0']
    %14 = vsyncpa [#allocation5], 0
    %s15 = scalar_lea.sflag [#allocation5], 1
    %16 = vsyncpa %s15, 0
    %17 = vsyncpa [#allocation8], 0
    %18 = vsyncpa [#allocation6], 0
    %s19 = scalar_lea.sflag [#allocation6], 1
    %20 = vsyncpa %s19, 0
    loop: start=0, step=1, limit=4
    $region2: #{tpu_custom_call.1} parent=1 // loop_pre_header
      _
    $region3: #{tpu_custom_call.1} parent=1 // loop_header
      %s22 = sphi 0, %s26
      %p23 = scmp.ge.s32.totalorder %s22, 4
      %s32 = sphi 0, %s34
      %s35 = sphi 0, %s32
      %s36 = sphi 0, %s35
      %s52 = sphi 0, %s36
      %s58 = sphi 0, %s60
      %s61 = sphi 0, %s58
      %s62 = sphi 0, %s61
      %s78 = sphi 0, %s62
      %s82 = sphi 0, %s82
      %s84 = sphi 0, %s82
      %s85 = sphi 0, %s84
      %s99 = sphi 0, %s85
      %s103 = sphi 0, %s103
      %s105 = sphi 0, %s103
      %s106 = sphi 0, %s105
      %s120 = sphi 0, %s106
      %s124 = sphi 0, %s124
      %s126 = sphi 0, %s124
      %s127 = sphi 0, %s126
      %s141 = sphi 0, %s127
      %s145 = sphi 0, %s145
      %s147 = sphi 0, %s145
      %s148 = sphi 0, %s147
      %s162 = sphi 0, %s148
      %s166 = sphi 0, %s166
      %s168 = sphi 0, %s166
      %s169 = sphi 0, %s168
      %s183 = sphi 0, %s169
      %s187 = sphi 0, %s187
      %s189 = sphi 0, %s187
      %s190 = sphi 0, %s189
      %s204 = sphi 0, %s190
      %s208 = sphi 0, %s208
      %s210 = sphi 0, %s208
      %s211 = sphi 0, %s210
      %s225 = sphi 0, %s211
      %s231 = sphi 0, %s233
      %s234 = sphi 0, %s231
      %s235 = sphi 0, %s234
      %s251 = sphi 0, %s235
    $region4: #{tpu_custom_call.1} parent=1 // loop_header_branch
      %25 = sbr.rel (%p23) target = $region8
    $region5: #{tpu_custom_call.1} parent=1 // loop_body
      %s27 = ssub.s32 %s22, 1
      %s28 = ssub.s32 %s22, 2
      %s29 = sadd.s32 %s22, 1
      %s30 = ssub.s32 %s22, %s29
      %p31 = scmp.eq.s32.totalorder %s30, 0
      %s33 = sadd.s32 %s32, 1
      %s34 = scalar_select %p31, %s32, %s33
      %p37 = pneg %p31
      %p38 = scmp.eq.s32.totalorder %s22, 1
      %p39 = por %p37, %p38
      %p40 = scmp.ne.s32.totalorder %s32, %s35
      %p41 = scmp.eq.s32.totalorder %s22, 0
      %p42 = por %p40, %p41
      %p43 = scmp.ne.s32.totalorder %s32, %s35
      %p44 = scmp.eq.s32.totalorder %s27, 1
      %p45 = por %p43, %p44
      %p46 = scmp.ne.s32.totalorder %s35, %s36
      %p47 = scmp.eq.s32.totalorder %s27, 0
      %p48 = por %p46, %p47
      %p49 = scmp.ne.s32.totalorder %s35, %s36
      %p50 = scmp.eq.s32.totalorder %s28, 1
      %p51 = por %p49, %p50
      %p53 = scmp.ne.s32.totalorder %s36, %s52
      %p54 = scmp.eq.s32.totalorder %s28, 0
      %p55 = por %p53, %p54
      %s56 = ssub.s32 %s22, %s29
      %p57 = scmp.eq.s32.totalorder %s56, 0
      %s59 = sadd.s32 %s58, 1
      %s60 = scalar_select %p57, %s58, %s59
      %p63 = pneg %p57
      %p64 = scmp.eq.s32.totalorder %s22, 1
      %p65 = por %p63, %p64
      %p66 = scmp.ne.s32.totalorder %s58, %s61
      %p67 = scmp.eq.s32.totalorder %s22, 0
      %p68 = por %p66, %p67
      %p69 = scmp.ne.s32.totalorder %s58, %s61
      %p70 = scmp.eq.s32.totalorder %s27, 1
      %p71 = por %p69, %p70
      %p72 = scmp.ne.s32.totalorder %s61, %s62
      %p73 = scmp.eq.s32.totalorder %s27, 0
      %p74 = por %p72, %p73
      %p75 = scmp.ne.s32.totalorder %s61, %s62
      %p76 = scmp.eq.s32.totalorder %s28, 1
      %p77 = por %p75, %p76
      %p79 = scmp.ne.s32.totalorder %s62, %s78
      %p80 = scmp.eq.s32.totalorder %s28, 0
      %p81 = por %p79, %p80
      %s83 = sadd.s32 %s82, 1
      %p86 = scmp.eq.s32.totalorder %s22, 1
      %p87 = scmp.ne.s32.totalorder %s82, %s84
      %p88 = scmp.eq.s32.totalorder %s22, 0
      %p89 = por %p87, %p88
      %p90 = scmp.ne.s32.totalorder %s82, %s84
      %p91 = scmp.eq.s32.totalorder %s27, 1
      %p92 = por %p90, %p91
      %p93 = scmp.ne.s32.totalorder %s84, %s85
      %p94 = scmp.eq.s32.totalorder %s27, 0
      %p95 = por %p93, %p94
      %p96 = scmp.ne.s32.totalorder %s84, %s85
      %p97 = scmp.eq.s32.totalorder %s28, 1
      %p98 = por %p96, %p97
      %p100 = scmp.ne.s32.totalorder %s85, %s99
      %p101 = scmp.eq.s32.totalorder %s28, 0
      %p102 = por %p100, %p101
      %s104 = sadd.s32 %s103, 1
      %p107 = scmp.eq.s32.totalorder %s22, 1
      %p108 = scmp.ne.s32.totalorder %s103, %s105
      %p109 = scmp.eq.s32.totalorder %s22, 0
      %p110 = por %p108, %p109
      %p111 = scmp.ne.s32.totalorder %s103, %s105
      %p112 = scmp.eq.s32.totalorder %s27, 1
      %p113 = por %p111, %p112
      %p114 = scmp.ne.s32.totalorder %s105, %s106
      %p115 = scmp.eq.s32.totalorder %s27, 0
      %p116 = por %p114, %p115
      %p117 = scmp.ne.s32.totalorder %s105, %s106
      %p118 = scmp.eq.s32.totalorder %s28, 1
      %p119 = por %p117, %p118
      %p121 = scmp.ne.s32.totalorder %s106, %s120
      %p122 = scmp.eq.s32.totalorder %s28, 0
      %p123 = por %p121, %p122
      %s125 = sadd.s32 %s124, 1
      %p128 = scmp.eq.s32.totalorder %s22, 1
      %p129 = scmp.ne.s32.totalorder %s124, %s126
      %p130 = scmp.eq.s32.totalorder %s22, 0
      %p131 = por %p129, %p130
      %p132 = scmp.ne.s32.totalorder %s124, %s126
      %p133 = scmp.eq.s32.totalorder %s27, 1
      %p134 = por %p132, %p133
      %p135 = scmp.ne.s32.totalorder %s126, %s127
      %p136 = scmp.eq.s32.totalorder %s27, 0
      %p137 = por %p135, %p136
      %p138 = scmp.ne.s32.totalorder %s126, %s127
      %p139 = scmp.eq.s32.totalorder %s28, 1
      %p140 = por %p138, %p139
      %p142 = scmp.ne.s32.totalorder %s127, %s141
      %p143 = scmp.eq.s32.totalorder %s28, 0
      %p144 = por %p142, %p143
      %s146 = sadd.s32 %s145, 1
      %p149 = scmp.eq.s32.totalorder %s22, 1
      %p150 = scmp.ne.s32.totalorder %s145, %s147
      %p151 = scmp.eq.s32.totalorder %s22, 0
      %p152 = por %p150, %p151
      %p153 = scmp.ne.s32.totalorder %s145, %s147
      %p154 = scmp.eq.s32.totalorder %s27, 1
      %p155 = por %p153, %p154
      %p156 = scmp.ne.s32.totalorder %s147, %s148
      %p157 = scmp.eq.s32.totalorder %s27, 0
      %p158 = por %p156, %p157
      %p159 = scmp.ne.s32.totalorder %s147, %s148
      %p160 = scmp.eq.s32.totalorder %s28, 1
      %p161 = por %p159, %p160
      %p163 = scmp.ne.s32.totalorder %s148, %s162
      %p164 = scmp.eq.s32.totalorder %s28, 0
      %p165 = por %p163, %p164
      %s167 = sadd.s32 %s166, 1
      %p170 = scmp.eq.s32.totalorder %s22, 1
      %p171 = scmp.ne.s32.totalorder %s166, %s168
      %p172 = scmp.eq.s32.totalorder %s22, 0
      %p173 = por %p171, %p172
      %p174 = scmp.ne.s32.totalorder %s166, %s168
      %p175 = scmp.eq.s32.totalorder %s27, 1
      %p176 = por %p174, %p175
      %p177 = scmp.ne.s32.totalorder %s168, %s169
      %p178 = scmp.eq.s32.totalorder %s27, 0
      %p179 = por %p177, %p178
      %p180 = scmp.ne.s32.totalorder %s168, %s169
      %p181 = scmp.eq.s32.totalorder %s28, 1
      %p182 = por %p180, %p181
      %p184 = scmp.ne.s32.totalorder %s169, %s183
      %p185 = scmp.eq.s32.totalorder %s28, 0
      %p186 = por %p184, %p185
      %s188 = sadd.s32 %s187, 1
      %p191 = scmp.eq.s32.totalorder %s22, 1
      %p192 = scmp.ne.s32.totalorder %s187, %s189
      %p193 = scmp.eq.s32.totalorder %s22, 0
      %p194 = por %p192, %p193
      %p195 = scmp.ne.s32.totalorder %s187, %s189
      %p196 = scmp.eq.s32.totalorder %s27, 1
      %p197 = por %p195, %p196
      %p198 = scmp.ne.s32.totalorder %s189, %s190
      %p199 = scmp.eq.s32.totalorder %s27, 0
      %p200 = por %p198, %p199
      %p201 = scmp.ne.s32.totalorder %s189, %s190
      %p202 = scmp.eq.s32.totalorder %s28, 1
      %p203 = por %p201, %p202
      %p205 = scmp.ne.s32.totalorder %s190, %s204
      %p206 = scmp.eq.s32.totalorder %s28, 0
      %p207 = por %p205, %p206
      %s209 = sadd.s32 %s208, 1
      %p212 = scmp.eq.s32.totalorder %s22, 1
      %p213 = scmp.ne.s32.totalorder %s208, %s210
      %p214 = scmp.eq.s32.totalorder %s22, 0
      %p215 = por %p213, %p214
      %p216 = scmp.ne.s32.totalorder %s208, %s210
      %p217 = scmp.eq.s32.totalorder %s27, 1
      %p218 = por %p216, %p217
      %p219 = scmp.ne.s32.totalorder %s210, %s211
      %p220 = scmp.eq.s32.totalorder %s27, 0
      %p221 = por %p219, %p220
      %p222 = scmp.ne.s32.totalorder %s210, %s211
      %p223 = scmp.eq.s32.totalorder %s28, 1
      %p224 = por %p222, %p223
      %p226 = scmp.ne.s32.totalorder %s211, %s225
      %p227 = scmp.eq.s32.totalorder %s28, 0
      %p228 = por %p226, %p227
      %s229 = ssub.s32 %s22, %s29
      %p230 = scmp.eq.s32.totalorder %s229, 0
      %s232 = sadd.s32 %s231, 1
      %s233 = scalar_select %p230, %s231, %s232
      %p236 = pneg %p230
      %p237 = scmp.eq.s32.totalorder %s22, 1
      %p238 = por %p236, %p237
      %p239 = scmp.ne.s32.totalorder %s231, %s234
      %p240 = scmp.eq.s32.totalorder %s22, 0
      %p241 = por %p239, %p240
      %p242 = scmp.ne.s32.totalorder %s231, %s234
      %p243 = scmp.eq.s32.totalorder %s27, 1
      %p244 = por %p242, %p243
      %p245 = scmp.ne.s32.totalorder %s234, %s235
      %p246 = scmp.eq.s32.totalorder %s27, 0
      %p247 = por %p245, %p246
      %p248 = scmp.ne.s32.totalorder %s234, %s235
      %p249 = scmp.eq.s32.totalorder %s28, 1
      %p250 = por %p248, %p249
      %p252 = scmp.ne.s32.totalorder %s235, %s251
      %p253 = scmp.eq.s32.totalorder %s28, 0
      %p254 = por %p252, %p253
      %p255 = scmp.le.s32.totalorder 1, %s22
      %p256 = scmp.lt.s32.totalorder %s22, 3
      %p257 = pnand %p255, %p256
      %p258 = pneg %p257
      // Predicated region
      $region9: #{tpu_custom_call.1} parent=5 // pred_check
        _
      $region10: #{tpu_custom_call.1} parent=5 // pred_check_branch
        %260 = sbr.rel (%p257) target = $region12
      $region11: #{tpu_custom_call.1} parent=5 // pred_region
        %s261 = ssub.s32 %s22, 1
        // Predicated region
        $region13: #{tpu_custom_call.1} parent=11 // pred_check
          %p262 = pneg %p95
        $region14: #{tpu_custom_call.1} parent=11 // pred_check_branch
          %264 = sbr.rel (%p262) target = $region16
        $region15: #{tpu_custom_call.1} parent=11 // pred_region
          _
        $region16: #{tpu_custom_call.1} parent=11 // pred_fallthru
          _
        // Predicated region
        $region17: #{tpu_custom_call.1} parent=11 // pred_check
          %p265 = pneg %p116
        $region18: #{tpu_custom_call.1} parent=11 // pred_check_branch
          %267 = sbr.rel (%p265) target = $region20
        $region19: #{tpu_custom_call.1} parent=11 // pred_region
          _
        $region20: #{tpu_custom_call.1} parent=11 // pred_fallthru
          _
        // Predicated region
        $region21: #{tpu_custom_call.1} parent=11 // pred_check
          %p268 = pneg %p137
        $region22: #{tpu_custom_call.1} parent=11 // pred_check_branch
          %270 = sbr.rel (%p268) target = $region24
        $region23: #{tpu_custom_call.1} parent=11 // pred_region
          %272 = vsyncadd [#allocation8], 0
          %s274 = sshll.u32 %s4, 4
          %s275 = int_to_ptr.hbm [resolvable:$true] %s274
          %s276 = sshll.u32 [#allocation7], 4
          %s277 = int_to_ptr.vmem [resolvable:$true] %s276
          %279 = dma.hbm_to_vmem [thread:$0]  %s275, 64, %s277, [#allocation8]
        $region24: #{tpu_custom_call.1} parent=11 // pred_fallthru
          _
        // Predicated region
        $region25: #{tpu_custom_call.1} parent=11 // pred_check
          %p280 = pneg %p158
        $region26: #{tpu_custom_call.1} parent=11 // pred_check_branch
          %282 = sbr.rel (%p280) target = $region28
        $region27: #{tpu_custom_call.1} parent=11 // pred_region
          %284 = vsyncadd [#allocation8], 0
          %s286 = sshll.u32 %s5, 4
          %s287 = int_to_ptr.hbm [resolvable:$true] %s286
          %s288 = sshll.u32 [#allocation9], 4
          %s289 = int_to_ptr.vmem [resolvable:$true] %s288
          %291 = dma.hbm_to_vmem [thread:$0]  %s287, 64, %s289, [#allocation8]
        $region28: #{tpu_custom_call.1} parent=11 // pred_fallthru
          _
        // Predicated region
        $region29: #{tpu_custom_call.1} parent=11 // pred_check
          %p292 = pneg %p179
        $region30: #{tpu_custom_call.1} parent=11 // pred_check_branch
          %294 = sbr.rel (%p292) target = $region32
        $region31: #{tpu_custom_call.1} parent=11 // pred_region
          _
        $region32: #{tpu_custom_call.1} parent=11 // pred_fallthru
          _
        // Predicated region
        $region33: #{tpu_custom_call.1} parent=11 // pred_check
          %p295 = pneg %p200
        $region34: #{tpu_custom_call.1} parent=11 // pred_check_branch
          %297 = sbr.rel (%p295) target = $region36
        $region35: #{tpu_custom_call.1} parent=11 // pred_region
          _
        $region36: #{tpu_custom_call.1} parent=11 // pred_fallthru
          _
        // Predicated region
        $region37: #{tpu_custom_call.1} parent=11 // pred_check
          %p298 = pneg %p221
        $region38: #{tpu_custom_call.1} parent=11 // pred_check_branch
          %300 = sbr.rel (%p298) target = $region40
        $region39: #{tpu_custom_call.1} parent=11 // pred_region
          _
        $region40: #{tpu_custom_call.1} parent=11 // pred_fallthru
          _
      $region12: #{tpu_custom_call.1} parent=5 // pred_fallthru
        _
      %p301 = scmp.lt.s32.totalorder %s22, 2
      // Predicated region
      $region41: #{tpu_custom_call.1} parent=5 // pred_check
        %p302 = pneg %p301
      $region42: #{tpu_custom_call.1} parent=5 // pred_check_branch
        %304 = sbr.rel (%p302) target = $region44
      $region43: #{tpu_custom_call.1} parent=5 // pred_region
        // Predicated region
        $region45: #{tpu_custom_call.1} parent=43 // pred_check
          %p305 = pneg %p42
        $region46: #{tpu_custom_call.1} parent=43 // pred_check_branch
          %307 = sbr.rel (%p305) target = $region48
        $region47: #{tpu_custom_call.1} parent=43 // pred_region
          %p308 = scmp.lt.s32.totalorder %s22, 1
          %s309 = scalar_select %p308, %s22, 1
          %s310 = smul.addr %s309, 2
          %s311 = smul.addr %s310, 4
          %s312 = scalar_lea.vmem %s0, %s311
        $region48: #{tpu_custom_call.1} parent=43 // pred_fallthru
          _
        // Predicated region
        $region49: #{tpu_custom_call.1} parent=43 // pred_check
          %p313 = pneg %p68
        $region50: #{tpu_custom_call.1} parent=43 // pred_check_branch
          %315 = sbr.rel (%p313) target = $region52
        $region51: #{tpu_custom_call.1} parent=43 // pred_region
          %s316 = sand.u32 %s58, 1
          %s317 = scalar_lea.sflag [#allocation5], %s316
          %s318 = sand.u32 %s58, 1
          %s319 = smul.addr %s318, 32
          %s320 = scalar_lea.vmem [#allocation4], %s319
          %322 = vsyncadd %s317, 0
          %s323 = smul.addr %s22, 4
          %s324 = smul.addr %s323, 8
          %s325 = scalar_lea.hbm %s1, %s324
          %s326 = sshll.u32 %s325, 4
          %s327 = int_to_ptr.hbm [resolvable:$true] %s326
          %s328 = sshll.u32 %s320, 4
          %s329 = int_to_ptr.vmem [resolvable:$true] %s328
          %334 = dma.hbm_to_vmem [thread:$0]  %s327, 512, %s329, %s317, 128, 128, 8
        $region52: #{tpu_custom_call.1} parent=43 // pred_fallthru
          _
      $region44: #{tpu_custom_call.1} parent=5 // pred_fallthru
        _
      %p335 = scmp.le.s32.totalorder 1, %s22
      %p336 = scmp.lt.s32.totalorder %s22, 3
      %p337 = pnand %p335, %p336
      %p338 = pneg %p337
      // Predicated region
      $region53: #{tpu_custom_call.1} parent=5 // pred_check
        _
      $region54: #{tpu_custom_call.1} parent=5 // pred_check_branch
        %340 = sbr.rel (%p337) target = $region56
      $region55: #{tpu_custom_call.1} parent=5 // pred_region
        %s341 = ssub.s32 %s22, 1
        %s342 = sand.u32 %s61, 1
        %s343 = scalar_lea.sflag [#allocation5], %s342
        %s344 = sand.u32 %s61, 1
        %s345 = smul.addr %s344, 32
        %s346 = scalar_lea.vmem [#allocation4], %s345
        // Predicated region
        $region57: #{tpu_custom_call.1} parent=55 // pred_check
          %p347 = pneg %p74
        $region58: #{tpu_custom_call.1} parent=55 // pred_check_branch
          %349 = sbr.rel (%p347) target = $region60
        $region59: #{tpu_custom_call.1} parent=55 // pred_region
          %351 = dma.done %s343, 512
        $region60: #{tpu_custom_call.1} parent=55 // pred_fallthru
          _
        // Predicated region
        $region61: #{tpu_custom_call.1} parent=55 // pred_check
          %p352 = pneg %p137
        $region62: #{tpu_custom_call.1} parent=55 // pred_check_branch
          %354 = sbr.rel (%p352) target = $region64
        $region63: #{tpu_custom_call.1} parent=55 // pred_region
          %356 = dma.done [#allocation8], 64
        $region64: #{tpu_custom_call.1} parent=55 // pred_fallthru
          _
        // Predicated region
        $region65: #{tpu_custom_call.1} parent=55 // pred_check
          %p357 = pneg %p158
        $region66: #{tpu_custom_call.1} parent=55 // pred_check_branch
          %359 = sbr.rel (%p357) target = $region68
        $region67: #{tpu_custom_call.1} parent=55 // pred_region
          %361 = dma.done [#allocation8], 64
        $region68: #{tpu_custom_call.1} parent=55 // pred_fallthru
          _
        %p362 = scmp.lt.s32.totalorder %s27, 1
        %s363 = scalar_select %p362, %s27, 1
        %s364 = smul.addr %s363, 2
        %s365 = smul.addr %s364, 4
        %s366 = scalar_lea.vmem %s0, %s365
        %p367 = pneg %p48
        %p368 = pneg %p45
        %s369 = sand.u32 %s61, 1
        %s370 = scalar_lea.sflag [#allocation5], %s369
        %s371 = sand.u32 %s61, 1
        %s372 = smul.addr %s371, 32
        %s373 = scalar_lea.vmem [#allocation4], %s372
        %p374 = pneg %p74
        %p375 = pneg %p71
        %p376 = pneg %p95
        %p377 = pneg %p92
        %p378 = pneg %p116
        %p379 = pneg %p113
        %p380 = pneg %p137
        %p381 = pneg %p134
        %p382 = pneg %p158
        %p383 = pneg %p155
        %p384 = pneg %p179
        %p385 = pneg %p176
        %p386 = pneg %p200
        %p387 = pneg %p197
        %p388 = pneg %p221
        %p389 = pneg %p218
        %p390 = pneg %p247
        %p391 = pneg %p244
        %s392 = sand.u32 %s234, 1
        %s393 = scalar_lea.sflag [#allocation6], %s392
        %s394 = sand.u32 %s234, 1
        %s395 = smul.addr %s394, 8
        %s396 = scalar_lea.vmem [#allocation10], %s395
        %p397 = scmp.lt.s32.totalorder %s27, 1
        %s398 = scalar_select %p397, %s27, 1
        %s399 = smul.addr %s398, 2
        %s400 = smul.addr %s399, 4
        %s401 = scalar_lea.vmem %s0, %s400
        %402 = vst [vmem:[#allocation2] sm:$0xff] 0.0
        %403 = vst [vmem:[#allocation2 + $0x18] sm:$0xff] 0.0
        %v404 = vld [vmem:[%s401] sm:$0xff]
        %406 = vst [vmem:[#allocation1] ss:$2 sm:$0xff] %v404
        %v407 = vld.sshfl [vmem:[#allocation1] sm:$0xff pattern:$0x75316420]
        %v408 = vld.sshfl [vmem:[#allocation1 + $0x8] sm:$0xff pattern:$0x75316420]
        %411 = vst [vmem:[#allocation2 + $0x8] sm:$0xf] %v407
        %412 = vst [vmem:[#allocation2 + $0x10] sm:$0xf] %v408
        %v413 = vld [vmem:[%s346] sm:$0xff]
        %v414 = vld [vmem:[%s346 + $0x8] sm:$0xff]
        %v415 = vld [vmem:[%s346 + $0x10] sm:$0xff]
        %v416 = vld [vmem:[%s346 + $0x18] sm:$0xff]
        %v417 = vld [vmem:[%s2] sm:$0xff]
        %vm418 = vcmask 64512
        %v420 = vsel %vm418, %v413, 0
        %422 = vmatpush.msra.mxu0 0.0
        %423 = vmatpush.msra.mxu0 0.0
        %424 = vmatpush.msra.mxu0 0.0
        %425 = vmatpush.msra.mxu0 0.0
        %426 = vmatpush.msra.mxu0 0.0
        %427 = vmatpush.msra.mxu0 0.0
        %428 = vmatpush.msra.mxu0 0.0
        %429 = vmatpush.msra.mxu0 0.0
        %430 = vmatpush.msra.mxu0 0.0
        %431 = vmatpush.msra.mxu0 0.0
        %432 = vmatpush.msra.mxu0 0.0
        %433 = vmatpush.msra.mxu0 0.0
        %434 = vmatpush.msra.mxu0 0.0
        %435 = vmatpush.msra.mxu0 0.0
        %436 = vmatpush.msra.mxu0 0.0
        %437 = vmatpush.msra.mxu0 %v417
        %438 = vmatmul.f32.gmra.mxu0 %v420
        %v439 = vpop.f32.mrf.mxu0
        %v440 = vadd.f32 0.0, %v439
        %441 = vdwg.mxu0
        %v443 = vsel %vm418, %v414, 0
        %445 = vmatpush.msra.mxu0 0.0
        %446 = vmatpush.msra.mxu0 0.0
        %447 = vmatpush.msra.mxu0 0.0
        %448 = vmatpush.msra.mxu0 0.0
        %449 = vmatpush.msra.mxu0 0.0
        %450 = vmatpush.msra.mxu0 0.0
        %451 = vmatpush.msra.mxu0 0.0
        %452 = vmatpush.msra.mxu0 0.0
        %453 = vmatpush.msra.mxu0 0.0
        %454 = vmatpush.msra.mxu0 0.0
        %455 = vmatpush.msra.mxu0 0.0
        %456 = vmatpush.msra.mxu0 0.0
        %457 = vmatpush.msra.mxu0 0.0
        %458 = vmatpush.msra.mxu0 0.0
        %459 = vmatpush.msra.mxu0 0.0
        %460 = vmatpush.msra.mxu0 %v417
        %461 = vmatmul.f32.gmra.mxu0 %v443
        %v462 = vpop.f32.mrf.mxu0
        %v463 = vadd.f32 0.0, %v462
        %464 = vdwg.mxu0
        %v466 = vsel %vm418, %v415, 0
        %468 = vmatpush.msra.mxu0 0.0
        %469 = vmatpush.msra.mxu0 0.0
        %470 = vmatpush.msra.mxu0 0.0
        %471 = vmatpush.msra.mxu0 0.0
        %472 = vmatpush.msra.mxu0 0.0
        %473 = vmatpush.msra.mxu0 0.0
        %474 = vmatpush.msra.mxu0 0.0
        %475 = vmatpush.msra.mxu0 0.0
        %476 = vmatpush.msra.mxu0 0.0
        %477 = vmatpush.msra.mxu0 0.0
        %478 = vmatpush.msra.mxu0 0.0
        %479 = vmatpush.msra.mxu0 0.0
        %480 = vmatpush.msra.mxu0 0.0
        %481 = vmatpush.msra.mxu0 0.0
        %482 = vmatpush.msra.mxu0 0.0
        %483 = vmatpush.msra.mxu0 %v417
        %484 = vmatmul.f32.gmra.mxu0 %v466
        %v485 = vpop.f32.mrf.mxu0
        %v486 = vadd.f32 0.0, %v485
        %487 = vdwg.mxu0
        %v489 = vsel %vm418, %v416, 0
        %491 = vmatpush.msra.mxu0 0.0
        %492 = vmatpush.msra.mxu0 0.0
        %493 = vmatpush.msra.mxu0 0.0
        %494 = vmatpush.msra.mxu0 0.0
        %495 = vmatpush.msra.mxu0 0.0
        %496 = vmatpush.msra.mxu0 0.0
        %497 = vmatpush.msra.mxu0 0.0
        %498 = vmatpush.msra.mxu0 0.0
        %499 = vmatpush.msra.mxu0 0.0
        %500 = vmatpush.msra.mxu0 0.0
        %501 = vmatpush.msra.mxu0 0.0
        %502 = vmatpush.msra.mxu0 0.0
        %503 = vmatpush.msra.mxu0 0.0
        %504 = vmatpush.msra.mxu0 0.0
        %505 = vmatpush.msra.mxu0 0.0
        %506 = vmatpush.msra.mxu0 %v417
        %507 = vmatmul.f32.gmra.mxu0 %v489
        %v508 = vpop.f32.mrf.mxu0
        %v509 = vadd.f32 0.0, %v508
        %510 = vdwg.mxu0
        %v511 = vld [vmem:[%s3] sm:$0xff]
        %v512 = vld [vmem:[%s3 + $0x8] sm:$0xff]
        %v514 = vsel %vm418, %v511, 0
        %v517 = vsel %vm418, %v512, 0
        %519 = vmatpush.msra.mxu0 0.0
        %520 = vmatpush.msra.mxu0 0.0
        %521 = vmatpush.msra.mxu0 0.0
        %522 = vmatpush.msra.mxu0 0.0
        %523 = vmatpush.msra.mxu0 0.0
        %524 = vmatpush.msra.mxu0 0.0
        %525 = vmatpush.msra.mxu0 0.0
        %526 = vmatpush.msra.mxu0 0.0
        %527 = vmatpush.msra.mxu0 0.0
        %528 = vmatpush.msra.mxu0 0.0
        %529 = vmatpush.msra.mxu0 0.0
        %530 = vmatpush.msra.mxu0 0.0
        %531 = vmatpush.msra.mxu0 0.0
        %532 = vmatpush.msra.mxu0 0.0
        %533 = vmatpush.msra.mxu0 0.0
        %534 = vmatpush.msra.mxu0 %v440
        %535 = vmatmul.f32.gmra.mxu0 %v514
        %v536 = vpop.f32.mrf.mxu0
        %v537 = vadd.f32 0.0, %v536
        %538 = vmatmul.f32.gmra.mxu0 %v517
        %v539 = vpop.f32.mrf.mxu0
        %v540 = vadd.f32 0.0, %v539
        %541 = vdwg.mxu0
        %542 = vmatpush.msra.mxu0 0.0
        %543 = vmatpush.msra.mxu0 0.0
        %544 = vmatpush.msra.mxu0 0.0
        %545 = vmatpush.msra.mxu0 0.0
        %546 = vmatpush.msra.mxu0 0.0
        %547 = vmatpush.msra.mxu0 0.0
        %548 = vmatpush.msra.mxu0 0.0
        %549 = vmatpush.msra.mxu0 0.0
        %550 = vmatpush.msra.mxu0 0.0
        %551 = vmatpush.msra.mxu0 0.0
        %552 = vmatpush.msra.mxu0 0.0
        %553 = vmatpush.msra.mxu0 0.0
        %554 = vmatpush.msra.mxu0 0.0
        %555 = vmatpush.msra.mxu0 0.0
        %556 = vmatpush.msra.mxu0 0.0
        %557 = vmatpush.msra.mxu0 %v463
        %558 = vmatmul.f32.gmra.mxu0 %v514
        %v559 = vpop.f32.mrf.mxu0
        %v560 = vadd.f32 0.0, %v559
        %561 = vmatmul.f32.gmra.mxu0 %v517
        %v562 = vpop.f32.mrf.mxu0
        %v563 = vadd.f32 0.0, %v562
        %564 = vdwg.mxu0
        %565 = vmatpush.msra.mxu0 0.0
        %566 = vmatpush.msra.mxu0 0.0
        %567 = vmatpush.msra.mxu0 0.0
        %568 = vmatpush.msra.mxu0 0.0
        %569 = vmatpush.msra.mxu0 0.0
        %570 = vmatpush.msra.mxu0 0.0
        %571 = vmatpush.msra.mxu0 0.0
        %572 = vmatpush.msra.mxu0 0.0
        %573 = vmatpush.msra.mxu0 0.0
        %574 = vmatpush.msra.mxu0 0.0
        %575 = vmatpush.msra.mxu0 0.0
        %576 = vmatpush.msra.mxu0 0.0
        %577 = vmatpush.msra.mxu0 0.0
        %578 = vmatpush.msra.mxu0 0.0
        %579 = vmatpush.msra.mxu0 0.0
        %580 = vmatpush.msra.mxu0 %v486
        %581 = vmatmul.f32.gmra.mxu0 %v514
        %v582 = vpop.f32.mrf.mxu0
        %v583 = vadd.f32 0.0, %v582
        %584 = vmatmul.f32.gmra.mxu0 %v517
        %v585 = vpop.f32.mrf.mxu0
        %v586 = vadd.f32 0.0, %v585
        %587 = vdwg.mxu0
        %588 = vmatpush.msra.mxu0 0.0
        %589 = vmatpush.msra.mxu0 0.0
        %590 = vmatpush.msra.mxu0 0.0
        %591 = vmatpush.msra.mxu0 0.0
        %592 = vmatpush.msra.mxu0 0.0
        %593 = vmatpush.msra.mxu0 0.0
        %594 = vmatpush.msra.mxu0 0.0
        %595 = vmatpush.msra.mxu0 0.0
        %596 = vmatpush.msra.mxu0 0.0
        %597 = vmatpush.msra.mxu0 0.0
        %598 = vmatpush.msra.mxu0 0.0
        %599 = vmatpush.msra.mxu0 0.0
        %600 = vmatpush.msra.mxu0 0.0
        %601 = vmatpush.msra.mxu0 0.0
        %602 = vmatpush.msra.mxu0 0.0
        %603 = vmatpush.msra.mxu0 %v509
        %604 = vmatmul.f32.gmra.mxu0 %v514
        %v605 = vpop.f32.mrf.mxu0
        %v606 = vadd.f32 0.0, %v605
        %607 = vmatmul.f32.gmra.mxu0 %v517
        %v608 = vpop.f32.mrf.mxu0
        %v609 = vadd.f32 0.0, %v608
        %610 = vdwg.mxu0
        %vm611 = vcmask 130048
        %612 = vst.msk [vmem:[#allocation3] sm:$0xff] %vm611, %v537
        %613 = vst.msk [vmem:[#allocation3 + $0x8] sm:$0xff] %vm611, %v540
        %614 = vst.msk [vmem:[#allocation3 + $0x10] sm:$0xff] %vm611, %v560
        %615 = vst.msk [vmem:[#allocation3 + $0x18] sm:$0xff] %vm611, %v563
        %616 = vst.msk [vmem:[#allocation3 + $0x20] sm:$0xff] %vm611, %v583
        %617 = vst.msk [vmem:[#allocation3 + $0x28] sm:$0xff] %vm611, %v586
        %618 = vst.msk [vmem:[#allocation3 + $0x30] sm:$0xff] %vm611, %v606
        %619 = vst.msk [vmem:[#allocation3 + $0x38] sm:$0xff] %vm611, %v609
        %v620 = vld [vmem:[#allocation3] sm:$0x1]
        %v621 = vld [vmem:[#allocation3 + $0x10] sm:$0x1]
        %v622 = vld [vmem:[#allocation3 + $0x20] sm:$0x1]
        %v623 = vld [vmem:[#allocation3 + $0x30] sm:$0x1]
        %v628 = vrot.slane %v620, 4
        %v629 = vrot.slane %v621, 3
        %vm630 = vcmask 1045509
        %v631 = vsel %vm630, %v629, %v628
        %v632 = vrot.slane %v622, 2
        %vm633 = vcmask 1046534
        %v634 = vsel %vm633, %v632, %v631
        %v635 = vrot.slane %v623, 1
        %vm636 = vcmask 1047559
        %v637 = vsel %vm636, %v635, %v634
        %vm639 = vcmask 130052
        %640 = vst.msk [vmem:[#allocation2 + $0x8] sm:$0xf0] %vm639, %v637
        %v641 = vld [vmem:[#allocation3 + $0x1] sm:$0x1]
        %v642 = vld [vmem:[#allocation3 + $0x11] sm:$0x1]
        %v643 = vld [vmem:[#allocation3 + $0x21] sm:$0x1]
        %v644 = vld [vmem:[#allocation3 + $0x31] sm:$0x1]
        %v649 = vrot.slane %v641, 4
        %v650 = vrot.slane %v642, 3
        %v651 = vsel %vm630, %v650, %v649
        %v652 = vrot.slane %v643, 2
        %v653 = vsel %vm633, %v652, %v651
        %v654 = vrot.slane %v644, 1
        %v655 = vsel %vm636, %v654, %v653
        %656 = vrot.lane.b32.xlu0 %v655, 16
        %v657 = vpop.permute.xlu0 %656
        %vm659 = vcmask 261252
        %660 = vst.msk [vmem:[#allocation2 + $0x8] sm:$0xf0] %vm659, %v657
        %v661 = vld [vmem:[#allocation3 + $0x2] sm:$0x1]
        %v662 = vld [vmem:[#allocation3 + $0x12] sm:$0x1]
        %v663 = vld [vmem:[#allocation3 + $0x22] sm:$0x1]
        %v664 = vld [vmem:[#allocation3 + $0x32] sm:$0x1]
        %v669 = vrot.slane %v661, 4
        %v670 = vrot.slane %v662, 3
        %v671 = vsel %vm630, %v670, %v669
        %v672 = vrot.slane %v663, 2
        %v673 = vsel %vm633, %v672, %v671
        %v674 = vrot.slane %v664, 1
        %v675 = vsel %vm636, %v674, %v673
        %676 = vrot.lane.b32.xlu0 %v675, 32
        %v677 = vpop.permute.xlu0 %676
        %vm679 = vcmask 392452
        %680 = vst.msk [vmem:[#allocation2 + $0x8] sm:$0xf0] %vm679, %v677
        %v681 = vld [vmem:[#allocation3 + $0x3] sm:$0x1]
        %v682 = vld [vmem:[#allocation3 + $0x13] sm:$0x1]
        %v683 = vld [vmem:[#allocation3 + $0x23] sm:$0x1]
        %v684 = vld [vmem:[#allocation3 + $0x33] sm:$0x1]
        %v689 = vrot.slane %v681, 4
        %v690 = vrot.slane %v682, 3
        %v691 = vsel %vm630, %v690, %v689
        %v692 = vrot.slane %v683, 2
        %v693 = vsel %vm633, %v692, %v691
        %v694 = vrot.slane %v684, 1
        %v695 = vsel %vm636, %v694, %v693
        %696 = vrot.lane.b32.xlu0 %v695, 48
        %v697 = vpop.permute.xlu0 %696
        %vm699 = vcmask 523652
        %700 = vst.msk [vmem:[#allocation2 + $0x8] sm:$0xf0] %vm699, %v697
        %v701 = vld [vmem:[#allocation3 + $0x4] sm:$0x1]
        %v702 = vld [vmem:[#allocation3 + $0x14] sm:$0x1]
        %v703 = vld [vmem:[#allocation3 + $0x24] sm:$0x1]
        %v704 = vld [vmem:[#allocation3 + $0x34] sm:$0x1]
        %v709 = vrot.slane %v701, 4
        %v710 = vrot.slane %v702, 3
        %v711 = vsel %vm630, %v710, %v709
        %v712 = vrot.slane %v703, 2
        %v713 = vsel %vm633, %v712, %v711
        %v714 = vrot.slane %v704, 1
        %v715 = vsel %vm636, %v714, %v713
        %716 = vrot.lane.b32.xlu0 %v715, 64
        %v717 = vpop.permute.xlu0 %716
        %vm719 = vcmask 654852
        %720 = vst.msk [vmem:[#allocation2 + $0x8] sm:$0xf0] %vm719, %v717
        %v721 = vld [vmem:[#allocation3 + $0x5] sm:$0x1]
        %v722 = vld [vmem:[#allocation3 + $0x15] sm:$0x1]
        %v723 = vld [vmem:[#allocation3 + $0x25] sm:$0x1]
        %v724 = vld [vmem:[#allocation3 + $0x35] sm:$0x1]
        %v729 = vrot.slane %v721, 4
        %v730 = vrot.slane %v722, 3
        %v731 = vsel %vm630, %v730, %v729
        %v732 = vrot.slane %v723, 2
        %v733 = vsel %vm633, %v732, %v731
        %v734 = vrot.slane %v724, 1
        %v735 = vsel %vm636, %v734, %v733
        %736 = vrot.lane.b32.xlu0 %v735, 80
        %v737 = vpop.permute.xlu0 %736
        %vm739 = vcmask 786052
        %740 = vst.msk [vmem:[#allocation2 + $0x8] sm:$0xf0] %vm739, %v737
        %v741 = vld [vmem:[#allocation3 + $0x6] sm:$0x1]
        %v742 = vld [vmem:[#allocation3 + $0x16] sm:$0x1]
        %v743 = vld [vmem:[#allocation3 + $0x26] sm:$0x1]
        %v744 = vld [vmem:[#allocation3 + $0x36] sm:$0x1]
        %v749 = vrot.slane %v741, 4
        %v750 = vrot.slane %v742, 3
        %v751 = vsel %vm630, %v750, %v749
        %v752 = vrot.slane %v743, 2
        %v753 = vsel %vm633, %v752, %v751
        %v754 = vrot.slane %v744, 1
        %v755 = vsel %vm636, %v754, %v753
        %756 = vrot.lane.b32.xlu0 %v755, 96
        %v757 = vpop.permute.xlu0 %756
        %vm759 = vcmask 917252
        %760 = vst.msk [vmem:[#allocation2 + $0x8] sm:$0xf0] %vm759, %v757
        %v761 = vld [vmem:[#allocation3 + $0x7] sm:$0x1]
        %v762 = vld [vmem:[#allocation3 + $0x17] sm:$0x1]
        %v763 = vld [vmem:[#allocation3 + $0x27] sm:$0x1]
        %v764 = vld [vmem:[#allocation3 + $0x37] sm:$0x1]
        %v769 = vrot.slane %v761, 4
        %v770 = vrot.slane %v762, 3
        %v771 = vsel %vm630, %v770, %v769
        %v772 = vrot.slane %v763, 2
        %v773 = vsel %vm633, %v772, %v771
        %v774 = vrot.slane %v764, 1
        %v775 = vsel %vm636, %v774, %v773
        %776 = vrot.lane.b32.xlu0 %v775, 112
        %v777 = vpop.permute.xlu0 %776
        %vm779 = vcmask 1048452
        %780 = vst.msk [vmem:[#allocation2 + $0x8] sm:$0xf0] %vm779, %v777
        %v781 = vld [vmem:[#allocation3 + $0x8] sm:$0x1]
        %v782 = vld [vmem:[#allocation3 + $0x18] sm:$0x1]
        %v783 = vld [vmem:[#allocation3 + $0x28] sm:$0x1]
        %v784 = vld [vmem:[#allocation3 + $0x38] sm:$0x1]
        %v789 = vrot.slane %v781, 4
        %v790 = vrot.slane %v782, 3
        %v791 = vsel %vm630, %v790, %v789
        %v792 = vrot.slane %v783, 2
        %v793 = vsel %vm633, %v792, %v791
        %v794 = vrot.slane %v784, 1
        %v795 = vsel %vm636, %v794, %v793
        %797 = vst.msk [vmem:[#allocation2 + $0x10] sm:$0xf0] %vm639, %v795
        %v798 = vld [vmem:[#allocation3 + $0x9] sm:$0x1]
        %v799 = vld [vmem:[#allocation3 + $0x19] sm:$0x1]
        %v800 = vld [vmem:[#allocation3 + $0x29] sm:$0x1]
        %v801 = vld [vmem:[#allocation3 + $0x39] sm:$0x1]
        %v806 = vrot.slane %v798, 4
        %v807 = vrot.slane %v799, 3
        %v808 = vsel %vm630, %v807, %v806
        %v809 = vrot.slane %v800, 2
        %v810 = vsel %vm633, %v809, %v808
        %v811 = vrot.slane %v801, 1
        %v812 = vsel %vm636, %v811, %v810
        %813 = vrot.lane.b32.xlu0 %v812, 16
        %v814 = vpop.permute.xlu0 %813
        %816 = vst.msk [vmem:[#allocation2 + $0x10] sm:$0xf0] %vm659, %v814
        %v817 = vld [vmem:[#allocation3 + $0xa] sm:$0x1]
        %v818 = vld [vmem:[#allocation3 + $0x1a] sm:$0x1]
        %v819 = vld [vmem:[#allocation3 + $0x2a] sm:$0x1]
        %v820 = vld [vmem:[#allocation3 + $0x3a] sm:$0x1]
        %v825 = vrot.slane %v817, 4
        %v826 = vrot.slane %v818, 3
        %v827 = vsel %vm630, %v826, %v825
        %v828 = vrot.slane %v819, 2
        %v829 = vsel %vm633, %v828, %v827
        %v830 = vrot.slane %v820, 1
        %v831 = vsel %vm636, %v830, %v829
        %832 = vrot.lane.b32.xlu0 %v831, 32
        %v833 = vpop.permute.xlu0 %832
        %835 = vst.msk [vmem:[#allocation2 + $0x10] sm:$0xf0] %vm679, %v833
        %v836 = vld [vmem:[#allocation3 + $0xb] sm:$0x1]
        %v837 = vld [vmem:[#allocation3 + $0x1b] sm:$0x1]
        %v838 = vld [vmem:[#allocation3 + $0x2b] sm:$0x1]
        %v839 = vld [vmem:[#allocation3 + $0x3b] sm:$0x1]
        %v844 = vrot.slane %v836, 4
        %v845 = vrot.slane %v837, 3
        %v846 = vsel %vm630, %v845, %v844
        %v847 = vrot.slane %v838, 2
        %v848 = vsel %vm633, %v847, %v846
        %v849 = vrot.slane %v839, 1
        %v850 = vsel %vm636, %v849, %v848
        %851 = vrot.lane.b32.xlu0 %v850, 48
        %v852 = vpop.permute.xlu0 %851
        %854 = vst.msk [vmem:[#allocation2 + $0x10] sm:$0xf0] %vm699, %v852
        %v855 = vld [vmem:[#allocation3 + $0xc] sm:$0x1]
        %v856 = vld [vmem:[#allocation3 + $0x1c] sm:$0x1]
        %v857 = vld [vmem:[#allocation3 + $0x2c] sm:$0x1]
        %v858 = vld [vmem:[#allocation3 + $0x3c] sm:$0x1]
        %v863 = vrot.slane %v855, 4
        %v864 = vrot.slane %v856, 3
        %v865 = vsel %vm630, %v864, %v863
        %v866 = vrot.slane %v857, 2
        %v867 = vsel %vm633, %v866, %v865
        %v868 = vrot.slane %v858, 1
        %v869 = vsel %vm636, %v868, %v867
        %870 = vrot.lane.b32.xlu0 %v869, 64
        %v871 = vpop.permute.xlu0 %870
        %873 = vst.msk [vmem:[#allocation2 + $0x10] sm:$0xf0] %vm719, %v871
        %v874 = vld [vmem:[#allocation3 + $0xd] sm:$0x1]
        %v875 = vld [vmem:[#allocation3 + $0x1d] sm:$0x1]
        %v876 = vld [vmem:[#allocation3 + $0x2d] sm:$0x1]
        %v877 = vld [vmem:[#allocation3 + $0x3d] sm:$0x1]
        %v882 = vrot.slane %v874, 4
        %v883 = vrot.slane %v875, 3
        %v884 = vsel %vm630, %v883, %v882
        %v885 = vrot.slane %v876, 2
        %v886 = vsel %vm633, %v885, %v884
        %v887 = vrot.slane %v877, 1
        %v888 = vsel %vm636, %v887, %v886
        %889 = vrot.lane.b32.xlu0 %v888, 80
        %v890 = vpop.permute.xlu0 %889
        %892 = vst.msk [vmem:[#allocation2 + $0x10] sm:$0xf0] %vm739, %v890
        %v893 = vld [vmem:[#allocation3 + $0xe] sm:$0x1]
        %v894 = vld [vmem:[#allocation3 + $0x1e] sm:$0x1]
        %v895 = vld [vmem:[#allocation3 + $0x2e] sm:$0x1]
        %v896 = vld [vmem:[#allocation3 + $0x3e] sm:$0x1]
        %v901 = vrot.slane %v893, 4
        %v902 = vrot.slane %v894, 3
        %v903 = vsel %vm630, %v902, %v901
        %v904 = vrot.slane %v895, 2
        %v905 = vsel %vm633, %v904, %v903
        %v906 = vrot.slane %v896, 1
        %v907 = vsel %vm636, %v906, %v905
        %908 = vrot.lane.b32.xlu0 %v907, 96
        %v909 = vpop.permute.xlu0 %908
        %911 = vst.msk [vmem:[#allocation2 + $0x10] sm:$0xf0] %vm759, %v909
        %v912 = vld [vmem:[#allocation3 + $0xf] sm:$0x1]
        %v913 = vld [vmem:[#allocation3 + $0x1f] sm:$0x1]
        %v914 = vld [vmem:[#allocation3 + $0x2f] sm:$0x1]
        %v915 = vld [vmem:[#allocation3 + $0x3f] sm:$0x1]
        %v920 = vrot.slane %v912, 4
        %v921 = vrot.slane %v913, 3
        %v922 = vsel %vm630, %v921, %v920
        %v923 = vrot.slane %v914, 2
        %v924 = vsel %vm633, %v923, %v922
        %v925 = vrot.slane %v915, 1
        %v926 = vsel %vm636, %v925, %v924
        %927 = vrot.lane.b32.xlu0 %v926, 112
        %v928 = vpop.permute.xlu0 %927
        %930 = vst.msk [vmem:[#allocation2 + $0x10] sm:$0xf0] %vm779, %v928
        %v931 = vld [vmem:[#allocation7] ss:$2 sm:$0x3]
        %s932 = scalar_lea.vmem [#allocation7], 1
        %v933 = vld [vmem:[%s932] ss:$2 sm:$0x3]
        %v934 = vld [vmem:[#allocation2] sm:$0xff]
        %v935 = vld [vmem:[#allocation2 + $0x8] sm:$0xff]
        %v936 = vld [vmem:[#allocation2 + $0x10] sm:$0xff]
        %v938 = vperm.slane %v931, 0
        %v939 = vperm.slane %v931, 1
        %940 = vrot.lane.b32.xlu0 %v938, 111
        %v941 = vpop.permute.xlu0 %940
        %942 = vrot.lane.b32.xlu0 %v939, 111
        %v943 = vpop.permute.xlu0 %942
        %vm944 = vcmask 908288
        %v945 = vsel %vm944, %v941, %v943
        %v949 = vmul.f32 %v934, %v941
        %v950 = vmul.f32 %v935, %v945
        %v951 = vmul.f32 %v936, %v943
        %v953 = vperm.slane %v933, 0
        %v954 = vperm.slane %v933, 1
        %955 = vrot.lane.b32.xlu0 %v953, 113
        %v956 = vpop.permute.xlu0 %955
        %957 = vrot.lane.b32.xlu0 %v954, 113
        %v958 = vpop.permute.xlu0 %957
        %vm959 = vcmask 924672
        %v960 = vsel %vm959, %v956, %v958
        %v964 = vmul.f32 %v934, %v956
        %v965 = vmul.f32 %v935, %v960
        %v966 = vmul.f32 %v936, %v958
        %967 = vrot.lane.b32.xlu0 %v938, 127
        %v968 = vpop.permute.xlu0 %967
        %969 = vrot.lane.b32.xlu0 %v939, 127
        %v970 = vpop.permute.xlu0 %969
        %vm971 = vcmask 1039360
        %v972 = vsel %vm971, %v968, %v970
        %v976 = vmul.f32 %v934, %v968
        %v977 = vmul.f32 %v935, %v972
        %v978 = vmul.f32 %v936, %v970
        %v979 = vld [vmem:[#allocation2 + $0x8] sm:$0xff]
        %v980 = vld [vmem:[#allocation2 + $0x10] sm:$0xff]
        %v981 = vld [vmem:[#allocation2 + $0x18] sm:$0xff]
        %982 = vrot.lane.b32.xlu0 %v953, 1
        %v983 = vpop.permute.xlu0 %982
        %984 = vrot.lane.b32.xlu0 %v954, 1
        %v985 = vpop.permute.xlu0 %984
        %vm986 = vcmask 7168
        %v987 = vsel %vm986, %v983, %v985
        %v991 = vmul.f32 %v979, %v983
        %v992 = vmul.f32 %v980, %v987
        %v993 = vmul.f32 %v981, %v985
        %994 = vrot.lane.b32.xlu0 %v938, 15
        %v995 = vpop.permute.xlu0 %994
        %996 = vrot.lane.b32.xlu0 %v939, 15
        %v997 = vpop.permute.xlu0 %996
        %vm998 = vcmask 121856
        %v999 = vsel %vm998, %v995, %v997
        %v1003 = vmul.f32 %v979, %v995
        %v1004 = vmul.f32 %v980, %v999
        %v1005 = vmul.f32 %v981, %v997
        %1006 = vrot.lane.b32.xlu0 %v953, 17
        %v1007 = vpop.permute.xlu0 %1006
        %1008 = vrot.lane.b32.xlu0 %v954, 17
        %v1009 = vpop.permute.xlu0 %1008
        %vm1010 = vcmask 138240
        %v1011 = vsel %vm1010, %v1007, %v1009
        %v1015 = vmul.f32 %v979, %v1007
        %v1016 = vmul.f32 %v980, %v1011
        %v1017 = vmul.f32 %v981, %v1009
        %1021 = vrot.lane.b32.xlu0 %v934, 127
        %v1022 = vpop.permute.xlu0 %1021
        %1023 = vrot.lane.b32.xlu0 %v935, 127
        %v1024 = vpop.permute.xlu0 %1023
        %1025 = vrot.lane.b32.xlu0 %v936, 127
        %v1026 = vpop.permute.xlu0 %1025
        %v1027 = vsel %vm971, %v1022, %v1024
        %v1028 = vsel %vm971, %v1024, %v1026
        %1032 = vrot.lane.b32.xlu0 %v964, 126
        %v1033 = vpop.permute.xlu0 %1032
        %1034 = vrot.lane.b32.xlu0 %v965, 126
        %v1035 = vpop.permute.xlu0 %1034
        %1036 = vrot.lane.b32.xlu0 %v966, 126
        %v1037 = vpop.permute.xlu0 %1036
        %vm1038 = vcmask 1031168
        %v1039 = vsel %vm1038, %v1033, %v1035
        %v1040 = vsel %vm1038, %v1035, %v1037
        %1044 = vrot.lane.b32.xlu0 %v976, 112
        %v1045 = vpop.permute.xlu0 %1044
        %1046 = vrot.lane.b32.xlu0 %v977, 112
        %v1047 = vpop.permute.xlu0 %1046
        %1048 = vrot.lane.b32.xlu0 %v978, 112
        %v1049 = vpop.permute.xlu0 %1048
        %vm1050 = vcmask 916480
        %v1051 = vsel %vm1050, %v1045, %v1047
        %v1052 = vsel %vm1050, %v1047, %v1049
        %1053 = vrot.lane.b32.xlu0 %v935, 111
        %v1054 = vpop.permute.xlu0 %1053
        %1055 = vrot.lane.b32.xlu0 %v936, 111
        %v1056 = vpop.permute.xlu0 %1055
        %v1057 = vsel %vm944, %v1054, %v1056
        %1061 = vrot.lane.b32.xlu0 %v991, 110
        %v1062 = vpop.permute.xlu0 %1061
        %1063 = vrot.lane.b32.xlu0 %v992, 110
        %v1064 = vpop.permute.xlu0 %1063
        %1065 = vrot.lane.b32.xlu0 %v993, 110
        %v1066 = vpop.permute.xlu0 %1065
        %vm1067 = vcmask 900096
        %v1068 = vsel %vm1067, %v1062, %v1064
        %v1069 = vsel %vm1067, %v1064, %v1066
        %1073 = vrot.lane.b32.xlu0 %v1003, 96
        %v1074 = vpop.permute.xlu0 %1073
        %1075 = vrot.lane.b32.xlu0 %v1004, 96
        %v1076 = vpop.permute.xlu0 %1075
        %1077 = vrot.lane.b32.xlu0 %v1005, 96
        %v1078 = vpop.permute.xlu0 %1077
        %vm1079 = vcmask 785408
        %v1080 = vsel %vm1079, %v1074, %v1076
        %v1081 = vsel %vm1079, %v1076, %v1078
        %1085 = vrot.lane.b32.xlu0 %v979, 95
        %v1086 = vpop.permute.xlu0 %1085
        %1087 = vrot.lane.b32.xlu0 %v980, 95
        %v1088 = vpop.permute.xlu0 %1087
        %1089 = vrot.lane.b32.xlu0 %v981, 95
        %v1090 = vpop.permute.xlu0 %1089
        %vm1091 = vcmask 777216
        %v1092 = vsel %vm1091, %v1086, %v1088
        %v1093 = vsel %vm1091, %v1088, %v1090
        %1097 = vrot.lane.b32.xlu0 %v1015, 94
        %v1098 = vpop.permute.xlu0 %1097
        %1099 = vrot.lane.b32.xlu0 %v1016, 94
        %v1100 = vpop.permute.xlu0 %1099
        %1101 = vrot.lane.b32.xlu0 %v1017, 94
        %v1102 = vpop.permute.xlu0 %1101
        %vm1103 = vcmask 769024
        %v1104 = vsel %vm1103, %v1098, %v1100
        %v1105 = vsel %vm1103, %v1100, %v1102
        %v1106 = vld [vmem:[#allocation9] sm:$0xf]
        %v1107 = vld [vmem:[%s6] sm:$0xf]
        %1109 = vset.pattern.permute.xlu0 0
        %1110 = vperm.xlu0 %1109, %v1107
        %v1111 = vpop.permute.xlu0 %1110
        %1116 = vrot.lane.b32.xlu0 %v949, 17
        %v1117 = vpop.permute.xlu0 %1116
        %1118 = vrot.lane.b32.xlu0 %v950, 17
        %v1119 = vpop.permute.xlu0 %1118
        %1120 = vrot.lane.b32.xlu0 %v951, 17
        %v1121 = vpop.permute.xlu0 %1120
        %1122 = vrot.lane.b32.xlu0 %v1027, 17
        %v1123 = vpop.permute.xlu0 %1122
        %1124 = vrot.lane.b32.xlu0 %v1028, 17
        %v1125 = vpop.permute.xlu0 %1124
        %1126 = vrot.lane.b32.xlu0 %v1026, 17
        %v1127 = vpop.permute.xlu0 %1126
        %1128 = vrot.lane.b32.xlu0 %v1039, 17
        %v1129 = vpop.permute.xlu0 %1128
        %1130 = vrot.lane.b32.xlu0 %v1040, 17
        %v1131 = vpop.permute.xlu0 %1130
        %1132 = vrot.lane.b32.xlu0 %v1037, 17
        %v1133 = vpop.permute.xlu0 %1132
        %1134 = vrot.lane.b32.xlu0 %v1051, 17
        %v1135 = vpop.permute.xlu0 %1134
        %1136 = vrot.lane.b32.xlu0 %v1052, 17
        %v1137 = vpop.permute.xlu0 %1136
        %1138 = vrot.lane.b32.xlu0 %v1049, 17
        %v1139 = vpop.permute.xlu0 %1138
        %1140 = vrot.lane.b32.xlu0 %v1054, 17
        %v1141 = vpop.permute.xlu0 %1140
        %1142 = vrot.lane.b32.xlu0 %v1057, 17
        %v1143 = vpop.permute.xlu0 %1142
        %1144 = vrot.lane.b32.xlu0 %v1056, 17
        %v1145 = vpop.permute.xlu0 %1144
        %1146 = vrot.lane.b32.xlu0 %v1062, 17
        %v1147 = vpop.permute.xlu0 %1146
        %1148 = vrot.lane.b32.xlu0 %v1068, 17
        %v1149 = vpop.permute.xlu0 %1148
        %1150 = vrot.lane.b32.xlu0 %v1069, 17
        %v1151 = vpop.permute.xlu0 %1150
        %1152 = vrot.lane.b32.xlu0 %v1074, 17
        %v1153 = vpop.permute.xlu0 %1152
        %1154 = vrot.lane.b32.xlu0 %v1080, 17
        %v1155 = vpop.permute.xlu0 %1154
        %1156 = vrot.lane.b32.xlu0 %v1081, 17
        %v1157 = vpop.permute.xlu0 %1156
        %1158 = vrot.lane.b32.xlu0 %v1086, 17
        %v1159 = vpop.permute.xlu0 %1158
        %1160 = vrot.lane.b32.xlu0 %v1092, 17
        %v1161 = vpop.permute.xlu0 %1160
        %1162 = vrot.lane.b32.xlu0 %v1093, 17
        %v1163 = vpop.permute.xlu0 %1162
        %1164 = vrot.lane.b32.xlu0 %v1098, 17
        %v1165 = vpop.permute.xlu0 %1164
        %1166 = vrot.lane.b32.xlu0 %v1104, 17
        %v1167 = vpop.permute.xlu0 %1166
        %1168 = vrot.lane.b32.xlu0 %v1105, 17
        %v1169 = vpop.permute.xlu0 %1168
        %v1170 = vsel %vm1010, %v1117, %v1119
        %v1171 = vsel %vm1010, %v1119, %v1121
        %v1172 = vsel %vm1010, %v1123, %v1125
        %v1173 = vsel %vm1010, %v1125, %v1127
        %v1174 = vsel %vm1010, %v1129, %v1131
        %v1175 = vsel %vm1010, %v1131, %v1133
        %v1176 = vsel %vm1010, %v1135, %v1137
        %v1177 = vsel %vm1010, %v1137, %v1139
        %v1178 = vsel %vm1010, %v1141, %v1143
        %v1179 = vsel %vm1010, %v1143, %v1145
        %v1180 = vsel %vm1010, %v1147, %v1149
        %v1181 = vsel %vm1010, %v1149, %v1151
        %v1182 = vsel %vm1010, %v1153, %v1155
        %v1183 = vsel %vm1010, %v1155, %v1157
        %v1184 = vsel %vm1010, %v1159, %v1161
        %v1185 = vsel %vm1010, %v1161, %v1163
        %v1186 = vsel %vm1010, %v1165, %v1167
        %v1187 = vsel %vm1010, %v1167, %v1169
        %vm1206 = vcmask 588800
        %v1208 = vsel %vm1206, %v1106, 0
        %1210 = vmatpush.msra.mxu0 0.0
        %1211 = vmatpush.msra.mxu0 0.0
        %1212 = vmatpush.msra.mxu0 0.0
        %1213 = vmatpush.msra.mxu0 0.0
        %1214 = vmatpush.msra.mxu0 0.0
        %1215 = vmatpush.msra.mxu0 0.0
        %1216 = vmatpush.msra.mxu0 0.0
        %1217 = vmatpush.msra.mxu0 %v1186
        %1218 = vmatpush.msra.mxu0 %v1184
        %1219 = vmatpush.msra.mxu0 %v1182
        %1220 = vmatpush.msra.mxu0 %v1180
        %1221 = vmatpush.msra.mxu0 %v1178
        %1222 = vmatpush.msra.mxu0 %v1176
        %1223 = vmatpush.msra.mxu0 %v1174
        %1224 = vmatpush.msra.mxu0 %v1172
        %1225 = vmatpush.msra.mxu0 %v1170
        %1226 = vmatmul.f32.gmra.mxu0 %v1208
        %v1227 = vpop.f32.mrf.mxu0
        %v1228 = vadd.f32 %v1111, %v1227
        %1229 = vdwg.mxu0
        %1230 = vmatpush.msra.mxu0 0.0
        %1231 = vmatpush.msra.mxu0 0.0
        %1232 = vmatpush.msra.mxu0 0.0
        %1233 = vmatpush.msra.mxu0 0.0
        %1234 = vmatpush.msra.mxu0 0.0
        %1235 = vmatpush.msra.mxu0 0.0
        %1236 = vmatpush.msra.mxu0 0.0
        %1237 = vmatpush.msra.mxu0 %v1187
        %1238 = vmatpush.msra.mxu0 %v1185
        %1239 = vmatpush.msra.mxu0 %v1183
        %1240 = vmatpush.msra.mxu0 %v1181
        %1241 = vmatpush.msra.mxu0 %v1179
        %1242 = vmatpush.msra.mxu0 %v1177
        %1243 = vmatpush.msra.mxu0 %v1175
        %1244 = vmatpush.msra.mxu0 %v1173
        %1245 = vmatpush.msra.mxu0 %v1171
        %1246 = vmatmul.f32.gmra.mxu0 %v1208
        %v1247 = vpop.f32.mrf.mxu0
        %v1248 = vadd.f32 %v1111, %v1247
        %1249 = vdwg.mxu0
        %v1250 = vmax.f32 %v1228, 0.0
        %v1251 = vmax.f32 %v1248, 0.0
        %1252 = vst [vmem:[#allocation2 + $0x8] sm:$0xf] %v1250
        %1253 = vst [vmem:[#allocation2 + $0x10] sm:$0xf] %v1251
        %v1254 = vld [vmem:[#allocation2] sm:$0xf]
        %v1255 = vld [vmem:[#allocation2 + $0x8] sm:$0xf]
        %v1256 = vld [vmem:[#allocation2 + $0x10] sm:$0xf]
        %v1257 = vmul.f32 %v1254, %v941
        %v1258 = vmul.f32 %v1255, %v945
        %v1259 = vmul.f32 %v1256, %v943
        %v1260 = vmul.f32 %v1254, %v956
        %v1261 = vmul.f32 %v1255, %v960
        %v1262 = vmul.f32 %v1256, %v958
        %v1263 = vmul.f32 %v1254, %v968
        %v1264 = vmul.f32 %v1255, %v972
        %v1265 = vmul.f32 %v1256, %v970
        %v1266 = vld [vmem:[#allocation2 + $0x8] sm:$0xf]
        %v1267 = vld [vmem:[#allocation2 + $0x10] sm:$0xf]
        %v1268 = vld [vmem:[#allocation2 + $0x18] sm:$0xf]
        %v1269 = vmul.f32 %v1266, %v983
        %v1270 = vmul.f32 %v1267, %v987
        %v1271 = vmul.f32 %v1268, %v985
        %v1272 = vmul.f32 %v1266, %v995
        %v1273 = vmul.f32 %v1267, %v999
        %v1274 = vmul.f32 %v1268, %v997
        %v1275 = vmul.f32 %v1266, %v1007
        %v1276 = vmul.f32 %v1267, %v1011
        %v1277 = vmul.f32 %v1268, %v1009
        %v1281 = vrot.slane %v1254, 4
        %v1282 = vrot.slane %v1255, 4
        %v1283 = vrot.slane %v1256, 4
        %1284 = vrot.lane.b32.xlu0 %v1281, 127
        %v1285 = vpop.permute.xlu0 %1284
        %1286 = vrot.lane.b32.xlu0 %v1282, 127
        %v1287 = vpop.permute.xlu0 %1286
        %1288 = vrot.lane.b32.xlu0 %v1283, 127
        %v1289 = vpop.permute.xlu0 %1288
        %v1290 = vsel %vm971, %v1285, %v1287
        %v1291 = vsel %vm971, %v1287, %v1289
        %1298 = vrot.lane.b32.xlu0 %v1260, 126
        %v1299 = vpop.permute.xlu0 %1298
        %1300 = vrot.lane.b32.xlu0 %v1261, 126
        %v1301 = vpop.permute.xlu0 %1300
        %1302 = vrot.lane.b32.xlu0 %v1262, 126
        %v1303 = vpop.permute.xlu0 %1302
        %v1304 = vsel %vm1038, %v1299, %v1301
        %v1305 = vsel %vm1038, %v1301, %v1303
        %v1312 = vrot.slane %v1263, 4
        %v1313 = vrot.slane %v1264, 4
        %v1314 = vrot.slane %v1265, 4
        %1315 = vrot.lane.b32.xlu0 %v1312, 112
        %v1316 = vpop.permute.xlu0 %1315
        %1317 = vrot.lane.b32.xlu0 %v1313, 112
        %v1318 = vpop.permute.xlu0 %1317
        %1319 = vrot.lane.b32.xlu0 %v1314, 112
        %v1320 = vpop.permute.xlu0 %1319
        %v1321 = vsel %vm1050, %v1316, %v1318
        %v1322 = vsel %vm1050, %v1318, %v1320
        %1326 = vrot.lane.b32.xlu0 %v1255, 111
        %v1327 = vpop.permute.xlu0 %1326
        %1328 = vrot.lane.b32.xlu0 %v1256, 111
        %v1329 = vpop.permute.xlu0 %1328
        %v1330 = vsel %vm944, %v1327, %v1329
        %v1337 = vrot.slane %v1269, 4
        %v1338 = vrot.slane %v1270, 4
        %v1339 = vrot.slane %v1271, 4
        %1340 = vrot.lane.b32.xlu0 %v1337, 110
        %v1341 = vpop.permute.xlu0 %1340
        %1342 = vrot.lane.b32.xlu0 %v1338, 110
        %v1343 = vpop.permute.xlu0 %1342
        %1344 = vrot.lane.b32.xlu0 %v1339, 110
        %v1345 = vpop.permute.xlu0 %1344
        %v1346 = vsel %vm1067, %v1341, %v1343
        %v1347 = vsel %vm1067, %v1343, %v1345
        %1354 = vrot.lane.b32.xlu0 %v1272, 96
        %v1355 = vpop.permute.xlu0 %1354
        %1356 = vrot.lane.b32.xlu0 %v1273, 96
        %v1357 = vpop.permute.xlu0 %1356
        %1358 = vrot.lane.b32.xlu0 %v1274, 96
        %v1359 = vpop.permute.xlu0 %1358
        %v1360 = vsel %vm1079, %v1355, %v1357
        %v1361 = vsel %vm1079, %v1357, %v1359
        %v1368 = vrot.slane %v1266, 4
        %v1369 = vrot.slane %v1267, 4
        %v1370 = vrot.slane %v1268, 4
        %1371 = vrot.lane.b32.xlu0 %v1368, 95
        %v1372 = vpop.permute.xlu0 %1371
        %1373 = vrot.lane.b32.xlu0 %v1369, 95
        %v1374 = vpop.permute.xlu0 %1373
        %1375 = vrot.lane.b32.xlu0 %v1370, 95
        %v1376 = vpop.permute.xlu0 %1375
        %v1377 = vsel %vm1091, %v1372, %v1374
        %v1378 = vsel %vm1091, %v1374, %v1376
        %1385 = vrot.lane.b32.xlu0 %v1275, 94
        %v1386 = vpop.permute.xlu0 %1385
        %1387 = vrot.lane.b32.xlu0 %v1276, 94
        %v1388 = vpop.permute.xlu0 %1387
        %1389 = vrot.lane.b32.xlu0 %v1277, 94
        %v1390 = vpop.permute.xlu0 %1389
        %v1391 = vsel %vm1103, %v1386, %v1388
        %v1392 = vsel %vm1103, %v1388, %v1390
        %vm1393 = vcmask 1043456
        %v1394 = vsel %vm1393, %v1257, %v1290
        %v1395 = vsel %vm1393, %v1258, %v1291
        %v1396 = vsel %vm1393, %v1259, %v1289
        %v1397 = vsel %vm1393, %v1304, %v1321
        %v1398 = vsel %vm1393, %v1305, %v1322
        %v1399 = vsel %vm1393, %v1303, %v1320
        %v1400 = vsel %vm1393, %v1327, %v1341
        %v1401 = vsel %vm1393, %v1330, %v1346
        %v1402 = vsel %vm1393, %v1329, %v1347
        %v1403 = vsel %vm1393, %v1355, %v1372
        %v1404 = vsel %vm1393, %v1360, %v1377
        %v1405 = vsel %vm1393, %v1361, %v1378
        %v1406 = vld [vmem:[%s7] sm:$0xf]
        %v1407 = vld [vmem:[%s8] sm:$0xf]
        %1409 = vset.pattern.permute.xlu0 0
        %1410 = vperm.xlu0 %1409, %v1407
        %v1411 = vpop.permute.xlu0 %1410
        %1425 = vrot.lane.b32.xlu0 %v1394, 17
        %v1426 = vpop.permute.xlu0 %1425
        %1427 = vrot.lane.b32.xlu0 %v1395, 17
        %v1428 = vpop.permute.xlu0 %1427
        %1429 = vrot.lane.b32.xlu0 %v1396, 17
        %v1430 = vpop.permute.xlu0 %1429
        %1431 = vrot.lane.b32.xlu0 %v1397, 17
        %v1432 = vpop.permute.xlu0 %1431
        %1433 = vrot.lane.b32.xlu0 %v1398, 17
        %v1434 = vpop.permute.xlu0 %1433
        %1435 = vrot.lane.b32.xlu0 %v1399, 17
        %v1436 = vpop.permute.xlu0 %1435
        %1437 = vrot.lane.b32.xlu0 %v1400, 17
        %v1438 = vpop.permute.xlu0 %1437
        %1439 = vrot.lane.b32.xlu0 %v1401, 17
        %v1440 = vpop.permute.xlu0 %1439
        %1441 = vrot.lane.b32.xlu0 %v1402, 17
        %v1442 = vpop.permute.xlu0 %1441
        %1443 = vrot.lane.b32.xlu0 %v1403, 17
        %v1444 = vpop.permute.xlu0 %1443
        %1445 = vrot.lane.b32.xlu0 %v1404, 17
        %v1446 = vpop.permute.xlu0 %1445
        %1447 = vrot.lane.b32.xlu0 %v1405, 17
        %v1448 = vpop.permute.xlu0 %1447
        %1449 = vrot.lane.b32.xlu0 %v1386, 17
        %v1450 = vpop.permute.xlu0 %1449
        %1451 = vrot.lane.b32.xlu0 %v1391, 17
        %v1452 = vpop.permute.xlu0 %1451
        %1453 = vrot.lane.b32.xlu0 %v1392, 17
        %v1454 = vpop.permute.xlu0 %1453
        %v1455 = vsel %vm1010, %v1426, %v1428
        %v1456 = vsel %vm1010, %v1428, %v1430
        %v1457 = vsel %vm1010, %v1432, %v1434
        %v1458 = vsel %vm1010, %v1434, %v1436
        %v1459 = vsel %vm1010, %v1438, %v1440
        %v1460 = vsel %vm1010, %v1440, %v1442
        %v1461 = vsel %vm1010, %v1444, %v1446
        %v1462 = vsel %vm1010, %v1446, %v1448
        %v1463 = vsel %vm1010, %v1450, %v1452
        %v1464 = vsel %vm1010, %v1452, %v1454
        %vm1473 = vcmask 293888
        %v1475 = vsel %vm1473, %v1406, 0
        %v1477 = vsel %vm1393, %v1463, 0
        %v1479 = vsel %vm1393, %v1464, 0
        %1481 = vmatpush.msra.mxu0 0.0
        %1482 = vmatpush.msra.mxu0 0.0
        %1483 = vmatpush.msra.mxu0 0.0
        %1484 = vmatpush.msra.mxu0 0.0
        %1485 = vmatpush.msra.mxu0 0.0
        %1486 = vmatpush.msra.mxu0 0.0
        %1487 = vmatpush.msra.mxu0 0.0
        %1488 = vmatpush.msra.mxu0 0.0
        %1489 = vmatpush.msra.mxu0 0.0
        %1490 = vmatpush.msra.mxu0 0.0
        %1491 = vmatpush.msra.mxu0 0.0
        %1492 = vmatpush.msra.mxu0 %v1477
        %1493 = vmatpush.msra.mxu0 %v1461
        %1494 = vmatpush.msra.mxu0 %v1459
        %1495 = vmatpush.msra.mxu0 %v1457
        %1496 = vmatpush.msra.mxu0 %v1455
        %1497 = vmatmul.f32.gmra.mxu0 %v1475
        %v1498 = vpop.f32.mrf.mxu0
        %v1499 = vadd.f32 %v1411, %v1498
        %1500 = vdwg.mxu0
        %1501 = vmatpush.msra.mxu0 0.0
        %1502 = vmatpush.msra.mxu0 0.0
        %1503 = vmatpush.msra.mxu0 0.0
        %1504 = vmatpush.msra.mxu0 0.0
        %1505 = vmatpush.msra.mxu0 0.0
        %1506 = vmatpush.msra.mxu0 0.0
        %1507 = vmatpush.msra.mxu0 0.0
        %1508 = vmatpush.msra.mxu0 0.0
        %1509 = vmatpush.msra.mxu0 0.0
        %1510 = vmatpush.msra.mxu0 0.0
        %1511 = vmatpush.msra.mxu0 0.0
        %1512 = vmatpush.msra.mxu0 %v1479
        %1513 = vmatpush.msra.mxu0 %v1462
        %1514 = vmatpush.msra.mxu0 %v1460
        %1515 = vmatpush.msra.mxu0 %v1458
        %1516 = vmatpush.msra.mxu0 %v1456
        %1517 = vmatmul.f32.gmra.mxu0 %v1475
        %v1518 = vpop.f32.mrf.mxu0
        %v1519 = vadd.f32 %v1411, %v1518
        %1520 = vdwg.mxu0
        %v1521 = vmax.f32 %v1499, 0.0
        %v1522 = vmax.f32 %v1519, 0.0
        %v1525 = vrot.slane %v1522, 4
        %v1526 = vsel %vm1393, %v1521, %v1525
        %1528 = vst [vmem:[%s396] sm:$0xff] %v1526
        %s1529 = sand.u32 %s234, 1
        %s1530 = scalar_lea.sflag [#allocation6], %s1529
        %s1531 = sand.u32 %s234, 1
        %s1532 = smul.addr %s1531, 8
        %s1533 = scalar_lea.vmem [#allocation10], %s1532
        // Predicated region
        $region69: #{tpu_custom_call.1} parent=55 // pred_check
          %p1534 = pneg %p244
        $region70: #{tpu_custom_call.1} parent=55 // pred_check_branch
          %1536 = sbr.rel (%p1534) target = $region72
        $region71: #{tpu_custom_call.1} parent=55 // pred_region
          %1538 = vsyncadd %s1530, 0
          %s1539 = smul.addr %s27, 2
          %s1540 = smul.addr %s1539, 4
          %s1541 = scalar_lea.hbm %s9, %s1540
          %s1543 = sshll.u32 %s1533, 4
          %s1544 = int_to_ptr.vmem [resolvable:$true] %s1543
          %s1545 = sshll.u32 %s1541, 4
          %s1546 = int_to_ptr.hbm [resolvable:$true] %s1545
          %1548 = dma.vmem_to_hbm [thread:$0]  %s1544, 128, %s1546, %s1530
        $region72: #{tpu_custom_call.1} parent=55 // pred_fallthru
          _
      $region56: #{tpu_custom_call.1} parent=5 // pred_fallthru
        _
      %p1549 = scmp.le.s32.totalorder 2, %s22
      // Predicated region
      $region73: #{tpu_custom_call.1} parent=5 // pred_check
        %p1550 = pneg %p1549
      $region74: #{tpu_custom_call.1} parent=5 // pred_check_branch
        %1552 = sbr.rel (%p1550) target = $region76
      $region75: #{tpu_custom_call.1} parent=5 // pred_region
        %s1553 = ssub.s32 %s22, 2
        // Predicated region
        $region77: #{tpu_custom_call.1} parent=75 // pred_check
          %p1554 = pneg %p250
        $region78: #{tpu_custom_call.1} parent=75 // pred_check_branch
          %1556 = sbr.rel (%p1554) target = $region80
        $region79: #{tpu_custom_call.1} parent=75 // pred_region
          %s1557 = sand.u32 %s235, 1
          %s1558 = scalar_lea.sflag [#allocation6], %s1557
          %s1559 = sand.u32 %s235, 1
          %s1560 = smul.addr %s1559, 8
          %s1561 = scalar_lea.vmem [#allocation10], %s1560
          %1563 = dma.done %s1558, 128
        $region80: #{tpu_custom_call.1} parent=75 // pred_fallthru
          _
      $region76: #{tpu_custom_call.1} parent=5 // pred_fallthru
        _
    $region6: #{tpu_custom_call.1} parent=1 // loop_footer
      %s26 = sadd.s32 1, %s22
    $region7: #{tpu_custom_call.1} parent=1 // loop_footer_branch
      %21 = sbr.rel target = $region3
    $region8: #{tpu_custom_call.1} parent=1 // loop_exit
      _
    %1564 = vsyncpa [#allocation5], 1
    %s1565 = scalar_lea.sflag [#allocation5], 1
    %1566 = vsyncpa %s1565, 1
    %1567 = vsyncpa [#allocation8], 1
    %1568 = vsyncpa [#allocation6], 1
    %s1569 = scalar_lea.sflag [#allocation6], 1
    %1570 = vsyncpa %s1569, 1

</llo_original>
